<compile_context>
chip_gen: v6e
topology: v6e:2x2x1
jax: 0.10.0
libtpu: 0.0.40
codegen_flags: <defaults>
</compile_context>

<pallas_src>
from functools import partial

import jax
import jax.numpy as jnp
from jax import lax
from jax.experimental import pallas as pl
from jax.experimental.pallas import tpu as pltpu


def _round_up(x, m):
    return ((x + m - 1) // m) * m


def lstmv2_kernel(x_ref, wih_a_ref, whh_a_ref, b_a_ref,
                  wcat_b_ref, b_b_ref, wcls_ref, bcls_ref,
                  out_ref, *, T, Bp, H1, H2):
    # ----- hoisted layer-A input projection: one big MXU matmul, bias folded in -----
    # x_ref: (T*Bp, D) bf16, result kept as SSA values (T*Bp*4H1 f32 = a few vregs).
    gin_a = jnp.dot(x_ref[...], wih_a_ref[...], preferred_element_type=jnp.float32)
    gin_a = gin_a + b_a_ref[...]                                  # (T*Bp, 4*H1)

    whh_a = whh_a_ref[...]                                        # (H1, 4*H1) bf16
    wcat_b = wcat_b_ref[...]                                      # (H1+H2, 4*H2) bf16
    b_b = jnp.broadcast_to(b_b_ref[...], (Bp, 4 * H2))            # hoisted broadcast

    # Hoisted per-layer lane scale/offset implementing sigmoid via a single tanh:
    #   sigmoid(x) = 0.5*(1 + tanh(x/2));  g-gate lanes keep plain tanh.
    def make_scale_off(H):
        lane = lax.broadcasted_iota(jnp.int32, (Bp, 4 * H), 1)
        is_g = (lane >= 2 * H) & (lane < 3 * H)
        scale = jnp.where(is_g, 1.0, 0.5).astype(jnp.float32)
        off = jnp.where(is_g, 0.0, 0.5).astype(jnp.float32)
        return scale, off

    scale_a, off_a = make_scale_off(H1)
    scale_b, off_b = make_scale_off(H2)

    def cell_update(gates, c, H, scale, off):
        th = jnp.tanh(gates * scale)          # one EUP pass over the full 4H tile
        act = th * scale + off                # VPU fixup: i/f/o lanes -> sigmoid
        i = act[:, 0 * H:1 * H]
        f = act[:, 1 * H:2 * H]
        g = act[:, 2 * H:3 * H]
        o = act[:, 3 * H:4 * H]
        c_new = f * c + i * g
        h_new = o * jnp.tanh(c_new)
        return h_new, c_new

    h_a = jnp.zeros((Bp, H1), jnp.float32)
    c_a = jnp.zeros((Bp, H1), jnp.float32)
    h_b = jnp.zeros((Bp, H2), jnp.float32)
    c_b = jnp.zeros((Bp, H2), jnp.float32)

    # ----- software-pipelined recurrence (fully unrolled; T static & small) -----
    # At combined step t (before rebinds): h_a == h_a[t-1], h_b == h_b[t-2].
    #   layer A step t   : gates_a = gin_a[t] + h_a[t-1] @ Whh_a
    #   layer B step t-1 : gates_b = [h_a[t-1] | h_b[t-2]] @ [Wih_b; Whh_b] + b_b
    # The two matmuls are independent, so MXU/EUP latencies of the layers overlap.
    for t in range(T + 1):
        gates_a = None
        gates_b = None
        if t < T:
            gates_a = (gin_a[t * Bp:(t + 1) * Bp, :]
                       + jnp.dot(h_a.astype(jnp.bfloat16), whh_a,
                                 preferred_element_type=jnp.float32))
        if t >= 1:
            lhs_b = jnp.concatenate([h_a, h_b], axis=1).astype(jnp.bfloat16)
            gates_b = b_b + jnp.dot(lhs_b, wcat_b,
                                    preferred_element_type=jnp.float32)
        if t < T:
            h_a, c_a = cell_update(gates_a, c_a, H1, scale_a, off_a)
        if t >= 1:
            h_b, c_b = cell_update(gates_b, c_b, H2, scale_b, off_b)

    # ----- classifier on last-timestep hidden of layer B (bf16 MXU, f32 accumulate) -----
    out_ref[...] = (jnp.dot(h_b.astype(jnp.bfloat16), wcls_ref[...],
                            preferred_element_type=jnp.float32)
                    + bcls_ref[...])


def _lstmv2_forward_impl(x0, params):
    """x0: (B, C, H, W) float32. Returns (logits (B, num_classes), [])."""
    wih_a, whh_a, b_a, wih_b, whh_b, b_b, wcls, bcls = params
    B = x0.shape[0]
    T = x0.shape[3]
    D = x0.shape[1] * x0.shape[2]
    H1 = whh_a.shape[0]
    H2 = whh_b.shape[0]
    C = wcls.shape[1]

    Bp = _round_up(B, 8)       # full sublane groups
    Cp = _round_up(C, 128)     # lane-dense classifier store

    # Single fused relayout (whole forward is jitted, so reshape + transpose + pad +
    # bf16 cast collapse into one XLA fusion = one HBM pass before the kernel).
    x = jnp.transpose(x0.reshape(B, D, T), (2, 0, 1))     # (T, B, D) time-major
    x = jnp.pad(x, ((0, 0), (0, Bp - B), (0, 0)))
    x2d = x.reshape(T * Bp, D).astype(jnp.bfloat16)

    # bf16 MXU-native weights; biases stay f32.  Layer-B input + recurrent weights
    # are stacked so the in-kernel recurrence does a single fused matmul per step.
    wih_a_bf = wih_a.astype(jnp.bfloat16)
    whh_a_bf = whh_a.astype(jnp.bfloat16)
    wcat_b_bf = jnp.concatenate([wih_b, whh_b], axis=0).astype(jnp.bfloat16)
    wcls_bf = jnp.pad(wcls, ((0, 0), (0, Cp - C))).astype(jnp.bfloat16)
    bcls_p = jnp.pad(bcls, ((0, 0), (0, Cp - C)))

    vmem = pl.BlockSpec(memory_space=pltpu.MemorySpace.VMEM)
    kernel = partial(lstmv2_kernel, T=T, Bp=Bp, H1=H1, H2=H2)
    logits_p = pl.pallas_call(
        kernel,
        out_shape=jax.ShapeDtypeStruct((Bp, Cp), jnp.float32),
        in_specs=[vmem] * 8,
        out_specs=vmem,
        compiler_params=pltpu.CompilerParams(vmem_limit_bytes=32 * 1024 * 1024),
    )(x2d, wih_a_bf, whh_a_bf, b_a, wcat_b_bf, b_b, wcls_bf, bcls_p)
    return logits_p[:B, :C], []


lstmv2_forward = jax.jit(_lstmv2_forward_impl)


def init_params(key, D, H1, H2, C):
    """Deterministic synthetic params, PyTorch-style uniform(-1/sqrt(H), 1/sqrt(H)).

    Weights are stored pre-transposed as (in_dim, 4*H), gate order [i, f, g, o];
    biases are the combined b_ih + b_hh, shaped (1, 4*H)."""
    ks = jax.random.split(key, 10)

    def u(k, shape, h):
        s = 1.0 / (h ** 0.5)
        return jax.random.uniform(k, shape, jnp.float32, -s, s)

    wih_a = u(ks[0], (D, 4 * H1), H1)
    whh_a = u(ks[1], (H1, 4 * H1), H1)
    b_a = u(ks[2], (1, 4 * H1), H1) + u(ks[3], (1, 4 * H1), H1)
    wih_b = u(ks[4], (H1, 4 * H2), H2)
    whh_b = u(ks[5], (H2, 4 * H2), H2)
    b_b = u(ks[6], (1, 4 * H2), H2) + u(ks[7], (1, 4 * H2), H2)
    wcls = u(ks[8], (H2, C), H2)
    bcls = u(ks[9], (1, C), H2)
    return (wih_a, whh_a, b_a, wih_b, whh_b, b_b, wcls, bcls)


def reference_forward(x0, params):
    """Pure-JAX f32 reference with identical math (for validation)."""
    wih_a, whh_a, b_a, wih_b, whh_b, b_b, wcls, bcls = params
    B, _, _, W = x0.shape
    x = jnp.transpose(x0.reshape(B, -1, W), (0, 2, 1))   # (B, T, D) batch-first
    T = x.shape[1]

    def run_layer(seq, w_ih, w_hh, b, H):
        h = jnp.zeros((B, H), jnp.float32)
        c = jnp.zeros((B, H), jnp.float32)
        outs = []
        for t in range(T):
            g = seq[:, t, :] @ w_ih + h @ w_hh + b
            i = jax.nn.sigmoid(g[:, 0 * H:1 * H])
            f = jax.nn.sigmoid(g[:, 1 * H:2 * H])
            gg = jnp.tanh(g[:, 2 * H:3 * H])
            o = jax.nn.sigmoid(g[:, 3 * H:4 * H])
            c = f * c + i * gg
            h = o * jnp.tanh(c)
            outs.append(h)
        return jnp.stack(outs, axis=1)

    seq_a = run_layer(x, wih_a, whh_a, b_a, whh_a.shape[0])
    seq_b = run_layer(seq_a, wih_b, whh_b, b_b, whh_b.shape[0])
    return seq_b[:, -1, :] @ wcls + bcls


if __name__ == "__main__":
    # Small shapes consistent with the module: x0 (B, C, H, W) -> dim_fc = C*H, seq_len = W.
    B, Cin, Hin, Win = 2, 4, 6, 8
    dim_fc = Cin * Hin          # LSTM input dim = 24
    hidden1 = 32                # hidden_dim1
    hidden2 = 32                # hidden_dim2
    num_classes = 10

    key = jax.random.PRNGKey(0)
    kx, kp = jax.random.split(key)
    x0 = jax.random.normal(kx, (B, Cin, Hin, Win), jnp.float32)
    params = init_params(kp, dim_fc, hidden1, hidden2, num_classes)

    logits, action_all_base = lstmv2_forward(x0, params)
    logits = jax.block_until_ready(logits)

    ref = reference_forward(x0, params)
    assert logits.shape == (B, num_classes)
    assert action_all_base == []
    # bf16 MXU operands / bf16 activations vs f32 reference (tightened per review).
    err = float(jnp.max(jnp.abs(logits - ref)))
    assert err < 2e-2, f"mismatch vs pure-JAX reference: {err}"

    print("KERNEL_OK")
</pallas_src>

<mosaic_0001>
module attributes {stable_mosaic.version = 11 : i64} {
  func.func @lstmv2_kernel(%arg0: memref<64x24xbf16, #tpu.memory_space<vmem>>, %arg1: memref<24x128xbf16, #tpu.memory_space<vmem>>, %arg2: memref<32x128xbf16, #tpu.memory_space<vmem>>, %arg3: memref<1x128xf32, #tpu.memory_space<vmem>>, %arg4: memref<64x128xbf16, #tpu.memory_space<vmem>>, %arg5: memref<1x128xf32, #tpu.memory_space<vmem>>, %arg6: memref<32x128xbf16, #tpu.memory_space<vmem>>, %arg7: memref<1x128xf32, #tpu.memory_space<vmem>>, %arg8: memref<8x128xf32, #tpu.memory_space<vmem>>) attributes {dimension_semantics = [], scalar_prefetch = 0 : i64, scratch_operands = 0 : i64, tpu.core_type = #tpu.core_type<tc>} {
    %c0 = arith.constant 0 : index
    %c0_0 = arith.constant 0 : index
    %0 = vector.load %arg0[%c0, %c0_0] : memref<64x24xbf16, #tpu.memory_space<vmem>>, vector<64x24xbf16>
    %c0_1 = arith.constant 0 : index
    %c0_2 = arith.constant 0 : index
    %1 = vector.load %arg1[%c0_1, %c0_2] : memref<24x128xbf16, #tpu.memory_space<vmem>>, vector<24x128xbf16>
    %cst = arith.constant dense<0.000000e+00> : vector<64x128xf32>
    %2 = tpu.matmul %0, %1, %cst {dimension_numbers = #tpu.dot_dimension_numbers<[1], [0], [0], [1], [0, 0, 1, 1], [], []>} : vector<64x24xbf16>, vector<24x128xbf16>, vector<64x128xf32> -> vector<64x128xf32>
    %c0_3 = arith.constant 0 : index
    %c0_4 = arith.constant 0 : index
    %3 = vector.load %arg3[%c0_3, %c0_4] : memref<1x128xf32, #tpu.memory_space<vmem>>, vector<1x128xf32>
    %4 = vector.broadcast %3 : vector<1x128xf32> to vector<64x128xf32>
    %5 = arith.addf %2, %4 : vector<64x128xf32>
    %c0_5 = arith.constant 0 : index
    %c0_6 = arith.constant 0 : index
    %6 = vector.load %arg2[%c0_5, %c0_6] : memref<32x128xbf16, #tpu.memory_space<vmem>>, vector<32x128xbf16>
    %c0_7 = arith.constant 0 : index
    %c0_8 = arith.constant 0 : index
    %7 = vector.load %arg4[%c0_7, %c0_8] : memref<64x128xbf16, #tpu.memory_space<vmem>>, vector<64x128xbf16>
    %c0_9 = arith.constant 0 : index
    %c0_10 = arith.constant 0 : index
    %8 = vector.load %arg5[%c0_9, %c0_10] : memref<1x128xf32, #tpu.memory_space<vmem>>, vector<1x128xf32>
    %9 = vector.shape_cast %8 : vector<1x128xf32> to vector<1x128xf32>
    %10 = vector.broadcast %9 : vector<1x128xf32> to vector<8x128xf32>
    %11 = tpu.iota {dimensions = array<i32: 1>} : vector<8x128xi32>
    %c64_i32 = arith.constant 64 : i32
    %12 = vector.broadcast %c64_i32 : i32 to vector<8x128xi32>
    %13 = arith.cmpi sge, %11, %12 : vector<8x128xi32>
    %c96_i32 = arith.constant 96 : i32
    %14 = vector.broadcast %c96_i32 : i32 to vector<8x128xi32>
    %15 = arith.cmpi slt, %11, %14 : vector<8x128xi32>
    %16 = arith.andi %13, %15 : vector<8x128xi1>
    %cst_11 = arith.constant 1.000000e+00 : f32
    %cst_12 = arith.constant 5.000000e-01 : f32
    %17 = vector.broadcast %cst_11 : f32 to vector<8x128xf32>
    %18 = vector.broadcast %cst_12 : f32 to vector<8x128xf32>
    %19 = arith.select %16, %17, %18 : vector<8x128xi1>, vector<8x128xf32>
    %cst_13 = arith.constant 0.000000e+00 : f32
    %cst_14 = arith.constant 5.000000e-01 : f32
    %20 = vector.broadcast %cst_13 : f32 to vector<8x128xf32>
    %21 = vector.broadcast %cst_14 : f32 to vector<8x128xf32>
    %22 = arith.select %16, %20, %21 : vector<8x128xi1>, vector<8x128xf32>
    %23 = tpu.iota {dimensions = array<i32: 1>} : vector<8x128xi32>
    %c64_i32_15 = arith.constant 64 : i32
    %24 = vector.broadcast %c64_i32_15 : i32 to vector<8x128xi32>
    %25 = arith.cmpi sge, %23, %24 : vector<8x128xi32>
    %c96_i32_16 = arith.constant 96 : i32
    %26 = vector.broadcast %c96_i32_16 : i32 to vector<8x128xi32>
    %27 = arith.cmpi slt, %23, %26 : vector<8x128xi32>
    %28 = arith.andi %25, %27 : vector<8x128xi1>
    %cst_17 = arith.constant 1.000000e+00 : f32
    %cst_18 = arith.constant 5.000000e-01 : f32
    %29 = vector.broadcast %cst_17 : f32 to vector<8x128xf32>
    %30 = vector.broadcast %cst_18 : f32 to vector<8x128xf32>
    %31 = arith.select %28, %29, %30 : vector<8x128xi1>, vector<8x128xf32>
    %cst_19 = arith.constant 0.000000e+00 : f32
    %cst_20 = arith.constant 5.000000e-01 : f32
    %32 = vector.broadcast %cst_19 : f32 to vector<8x128xf32>
    %33 = vector.broadcast %cst_20 : f32 to vector<8x128xf32>
    %34 = arith.select %28, %32, %33 : vector<8x128xi1>, vector<8x128xf32>
    %cst_21 = arith.constant 0.000000e+00 : f32
    %35 = vector.broadcast %cst_21 : f32 to vector<8x32xf32>
    %cst_22 = arith.constant 0.000000e+00 : f32
    %36 = vector.broadcast %cst_22 : f32 to vector<8x32xf32>
    %cst_23 = arith.constant 0.000000e+00 : f32
    %37 = vector.broadcast %cst_23 : f32 to vector<8x32xf32>
    %cst_24 = arith.constant 0.000000e+00 : f32
    %38 = vector.broadcast %cst_24 : f32 to vector<8x32xf32>
    %39 = vector.extract_strided_slice %5 {offsets = [0, 0], sizes = [8, 128], strides = [1, 1]} : vector<64x128xf32> to vector<8x128xf32>
    %40 = arith.truncf %35 : vector<8x32xf32> to vector<8x32xbf16>
    %cst_25 = arith.constant dense<0.000000e+00> : vector<8x128xf32>
    %41 = tpu.matmul %40, %6, %cst_25 {dimension_numbers = #tpu.dot_dimension_numbers<[1], [0], [0], [1], [0, 0, 1, 1], [], []>} : vector<8x32xbf16>, vector<32x128xbf16>, vector<8x128xf32> -> vector<8x128xf32>
    %42 = arith.addf %39, %41 : vector<8x128xf32>
    %43 = arith.mulf %42, %19 : vector<8x128xf32>
    %44 = math.tanh %43 : vector<8x128xf32>
    %45 = arith.mulf %44, %19 : vector<8x128xf32>
    %46 = arith.addf %45, %22 : vector<8x128xf32>
    %47 = vector.extract_strided_slice %46 {offsets = [0, 0], sizes = [8, 32], strides = [1, 1]} : vector<8x128xf32> to vector<8x32xf32>
    %48 = vector.extract_strided_slice %46 {offsets = [0, 32], sizes = [8, 32], strides = [1, 1]} : vector<8x128xf32> to vector<8x32xf32>
    %49 = vector.extract_strided_slice %46 {offsets = [0, 64], sizes = [8, 32], strides = [1, 1]} : vector<8x128xf32> to vector<8x32xf32>
    %50 = vector.extract_strided_slice %46 {offsets = [0, 96], sizes = [8, 32], strides = [1, 1]} : vector<8x128xf32> to vector<8x32xf32>
    %51 = arith.mulf %48, %36 : vector<8x32xf32>
    %52 = arith.mulf %47, %49 : vector<8x32xf32>
    %53 = arith.addf %51, %52 : vector<8x32xf32>
    %54 = math.tanh %53 : vector<8x32xf32>
    %55 = arith.mulf %50, %54 : vector<8x32xf32>
    %56 = vector.extract_strided_slice %5 {offsets = [8, 0], sizes = [8, 128], strides = [1, 1]} : vector<64x128xf32> to vector<8x128xf32>
    %57 = arith.truncf %55 : vector<8x32xf32> to vector<8x32xbf16>
    %cst_26 = arith.constant dense<0.000000e+00> : vector<8x128xf32>
    %58 = tpu.matmul %57, %6, %cst_26 {dimension_numbers = #tpu.dot_dimension_numbers<[1], [0], [0], [1], [0, 0, 1, 1], [], []>} : vector<8x32xbf16>, vector<32x128xbf16>, vector<8x128xf32> -> vector<8x128xf32>
    %59 = arith.addf %56, %58 : vector<8x128xf32>
    %60 = tpu.concatenate %55, %37 in 1 : vector<8x32xf32>, vector<8x32xf32> -> vector<8x64xf32>
    %61 = arith.truncf %60 : vector<8x64xf32> to vector<8x64xbf16>
    %cst_27 = arith.constant dense<0.000000e+00> : vector<8x128xf32>
    %62 = tpu.matmul %61, %7, %cst_27 {dimension_numbers = #tpu.dot_dimension_numbers<[1], [0], [0], [1], [0, 0, 1, 1], [], []>} : vector<8x64xbf16>, vector<64x128xbf16>, vector<8x128xf32> -> vector<8x128xf32>
    %63 = arith.addf %10, %62 : vector<8x128xf32>
    %64 = arith.mulf %59, %19 : vector<8x128xf32>
    %65 = math.tanh %64 : vector<8x128xf32>
    %66 = arith.mulf %65, %19 : vector<8x128xf32>
    %67 = arith.addf %66, %22 : vector<8x128xf32>
    %68 = vector.extract_strided_slice %67 {offsets = [0, 0], sizes = [8, 32], strides = [1, 1]} : vector<8x128xf32> to vector<8x32xf32>
    %69 = vector.extract_strided_slice %67 {offsets = [0, 32], sizes = [8, 32], strides = [1, 1]} : vector<8x128xf32> to vector<8x32xf32>
    %70 = vector.extract_strided_slice %67 {offsets = [0, 64], sizes = [8, 32], strides = [1, 1]} : vector<8x128xf32> to vector<8x32xf32>
    %71 = vector.extract_strided_slice %67 {offsets = [0, 96], sizes = [8, 32], strides = [1, 1]} : vector<8x128xf32> to vector<8x32xf32>
    %72 = arith.mulf %69, %53 : vector<8x32xf32>
    %73 = arith.mulf %68, %70 : vector<8x32xf32>
    %74 = arith.addf %72, %73 : vector<8x32xf32>
    %75 = math.tanh %74 : vector<8x32xf32>
    %76 = arith.mulf %71, %75 : vector<8x32xf32>
    %77 = arith.mulf %63, %31 : vector<8x128xf32>
    %78 = math.tanh %77 : vector<8x128xf32>
    %79 = arith.mulf %78, %31 : vector<8x128xf32>
    %80 = arith.addf %79, %34 : vector<8x128xf32>
    %81 = vector.extract_strided_slice %80 {offsets = [0, 0], sizes = [8, 32], strides = [1, 1]} : vector<8x128xf32> to vector<8x32xf32>
    %82 = vector.extract_strided_slice %80 {offsets = [0, 32], sizes = [8, 32], strides = [1, 1]} : vector<8x128xf32> to vector<8x32xf32>
    %83 = vector.extract_strided_slice %80 {offsets = [0, 64], sizes = [8, 32], strides = [1, 1]} : vector<8x128xf32> to vector<8x32xf32>
    %84 = vector.extract_strided_slice %80 {offsets = [0, 96], sizes = [8, 32], strides = [1, 1]} : vector<8x128xf32> to vector<8x32xf32>
    %85 = arith.mulf %82, %38 : vector<8x32xf32>
    %86 = arith.mulf %81, %83 : vector<8x32xf32>
    %87 = arith.addf %85, %86 : vector<8x32xf32>
    %88 = math.tanh %87 : vector<8x32xf32>
    %89 = arith.mulf %84, %88 : vector<8x32xf32>
    %90 = vector.extract_strided_slice %5 {offsets = [16, 0], sizes = [8, 128], strides = [1, 1]} : vector<64x128xf32> to vector<8x128xf32>
    %91 = arith.truncf %76 : vector<8x32xf32> to vector<8x32xbf16>
    %cst_28 = arith.constant dense<0.000000e+00> : vector<8x128xf32>
    %92 = tpu.matmul %91, %6, %cst_28 {dimension_numbers = #tpu.dot_dimension_numbers<[1], [0], [0], [1], [0, 0, 1, 1], [], []>} : vector<8x32xbf16>, vector<32x128xbf16>, vector<8x128xf32> -> vector<8x128xf32>
    %93 = arith.addf %90, %92 : vector<8x128xf32>
    %94 = tpu.concatenate %76, %89 in 1 : vector<8x32xf32>, vector<8x32xf32> -> vector<8x64xf32>
    %95 = arith.truncf %94 : vector<8x64xf32> to vector<8x64xbf16>
    %cst_29 = arith.constant dense<0.000000e+00> : vector<8x128xf32>
    %96 = tpu.matmul %95, %7, %cst_29 {dimension_numbers = #tpu.dot_dimension_numbers<[1], [0], [0], [1], [0, 0, 1, 1], [], []>} : vector<8x64xbf16>, vector<64x128xbf16>, vector<8x128xf32> -> vector<8x128xf32>
    %97 = arith.addf %10, %96 : vector<8x128xf32>
    %98 = arith.mulf %93, %19 : vector<8x128xf32>
    %99 = math.tanh %98 : vector<8x128xf32>
    %100 = arith.mulf %99, %19 : vector<8x128xf32>
    %101 = arith.addf %100, %22 : vector<8x128xf32>
    %102 = vector.extract_strided_slice %101 {offsets = [0, 0], sizes = [8, 32], strides = [1, 1]} : vector<8x128xf32> to vector<8x32xf32>
    %103 = vector.extract_strided_slice %101 {offsets = [0, 32], sizes = [8, 32], strides = [1, 1]} : vector<8x128xf32> to vector<8x32xf32>
    %104 = vector.extract_strided_slice %101 {offsets = [0, 64], sizes = [8, 32], strides = [1, 1]} : vector<8x128xf32> to vector<8x32xf32>
    %105 = vector.extract_strided_slice %101 {offsets = [0, 96], sizes = [8, 32], strides = [1, 1]} : vector<8x128xf32> to vector<8x32xf32>
    %106 = arith.mulf %103, %74 : vector<8x32xf32>
    %107 = arith.mulf %102, %104 : vector<8x32xf32>
    %108 = arith.addf %106, %107 : vector<8x32xf32>
    %109 = math.tanh %108 : vector<8x32xf32>
    %110 = arith.mulf %105, %109 : vector<8x32xf32>
    %111 = arith.mulf %97, %31 : vector<8x128xf32>
    %112 = math.tanh %111 : vector<8x128xf32>
    %113 = arith.mulf %112, %31 : vector<8x128xf32>
    %114 = arith.addf %113, %34 : vector<8x128xf32>
    %115 = vector.extract_strided_slice %114 {offsets = [0, 0], sizes = [8, 32], strides = [1, 1]} : vector<8x128xf32> to vector<8x32xf32>
    %116 = vector.extract_strided_slice %114 {offsets = [0, 32], sizes = [8, 32], strides = [1, 1]} : vector<8x128xf32> to vector<8x32xf32>
    %117 = vector.extract_strided_slice %114 {offsets = [0, 64], sizes = [8, 32], strides = [1, 1]} : vector<8x128xf32> to vector<8x32xf32>
    %118 = vector.extract_strided_slice %114 {offsets = [0, 96], sizes = [8, 32], strides = [1, 1]} : vector<8x128xf32> to vector<8x32xf32>
    %119 = arith.mulf %116, %87 : vector<8x32xf32>
    %120 = arith.mulf %115, %117 : vector<8x32xf32>
    %121 = arith.addf %119, %120 : vector<8x32xf32>
    %122 = math.tanh %121 : vector<8x32xf32>
    %123 = arith.mulf %118, %122 : vector<8x32xf32>
    %124 = vector.extract_strided_slice %5 {offsets = [24, 0], sizes = [8, 128], strides = [1, 1]} : vector<64x128xf32> to vector<8x128xf32>
    %125 = arith.truncf %110 : vector<8x32xf32> to vector<8x32xbf16>
    %cst_30 = arith.constant dense<0.000000e+00> : vector<8x128xf32>
    %126 = tpu.matmul %125, %6, %cst_30 {dimension_numbers = #tpu.dot_dimension_numbers<[1], [0], [0], [1], [0, 0, 1, 1], [], []>} : vector<8x32xbf16>, vector<32x128xbf16>, vector<8x128xf32> -> vector<8x128xf32>
    %127 = arith.addf %124, %126 : vector<8x128xf32>
    %128 = tpu.concatenate %110, %123 in 1 : vector<8x32xf32>, vector<8x32xf32> -> vector<8x64xf32>
    %129 = arith.truncf %128 : vector<8x64xf32> to vector<8x64xbf16>
    %cst_31 = arith.constant dense<0.000000e+00> : vector<8x128xf32>
    %130 = tpu.matmul %129, %7, %cst_31 {dimension_numbers = #tpu.dot_dimension_numbers<[1], [0], [0], [1], [0, 0, 1, 1], [], []>} : vector<8x64xbf16>, vector<64x128xbf16>, vector<8x128xf32> -> vector<8x128xf32>
    %131 = arith.addf %10, %130 : vector<8x128xf32>
    %132 = arith.mulf %127, %19 : vector<8x128xf32>
    %133 = math.tanh %132 : vector<8x128xf32>
    %134 = arith.mulf %133, %19 : vector<8x128xf32>
    %135 = arith.addf %134, %22 : vector<8x128xf32>
    %136 = vector.extract_strided_slice %135 {offsets = [0, 0], sizes = [8, 32], strides = [1, 1]} : vector<8x128xf32> to vector<8x32xf32>
    %137 = vector.extract_strided_slice %135 {offsets = [0, 32], sizes = [8, 32], strides = [1, 1]} : vector<8x128xf32> to vector<8x32xf32>
    %138 = vector.extract_strided_slice %135 {offsets = [0, 64], sizes = [8, 32], strides = [1, 1]} : vector<8x128xf32> to vector<8x32xf32>
    %139 = vector.extract_strided_slice %135 {offsets = [0, 96], sizes = [8, 32], strides = [1, 1]} : vector<8x128xf32> to vector<8x32xf32>
    %140 = arith.mulf %137, %108 : vector<8x32xf32>
    %141 = arith.mulf %136, %138 : vector<8x32xf32>
    %142 = arith.addf %140, %141 : vector<8x32xf32>
    %143 = math.tanh %142 : vector<8x32xf32>
    %144 = arith.mulf %139, %143 : vector<8x32xf32>
    %145 = arith.mulf %131, %31 : vector<8x128xf32>
    %146 = math.tanh %145 : vector<8x128xf32>
    %147 = arith.mulf %146, %31 : vector<8x128xf32>
    %148 = arith.addf %147, %34 : vector<8x128xf32>
    %149 = vector.extract_strided_slice %148 {offsets = [0, 0], sizes = [8, 32], strides = [1, 1]} : vector<8x128xf32> to vector<8x32xf32>
    %150 = vector.extract_strided_slice %148 {offsets = [0, 32], sizes = [8, 32], strides = [1, 1]} : vector<8x128xf32> to vector<8x32xf32>
    %151 = vector.extract_strided_slice %148 {offsets = [0, 64], sizes = [8, 32], strides = [1, 1]} : vector<8x128xf32> to vector<8x32xf32>
    %152 = vector.extract_strided_slice %148 {offsets = [0, 96], sizes = [8, 32], strides = [1, 1]} : vector<8x128xf32> to vector<8x32xf32>
    %153 = arith.mulf %150, %121 : vector<8x32xf32>
    %154 = arith.mulf %149, %151 : vector<8x32xf32>
    %155 = arith.addf %153, %154 : vector<8x32xf32>
    %156 = math.tanh %155 : vector<8x32xf32>
    %157 = arith.mulf %152, %156 : vector<8x32xf32>
    %158 = vector.extract_strided_slice %5 {offsets = [32, 0], sizes = [8, 128], strides = [1, 1]} : vector<64x128xf32> to vector<8x128xf32>
    %159 = arith.truncf %144 : vector<8x32xf32> to vector<8x32xbf16>
    %cst_32 = arith.constant dense<0.000000e+00> : vector<8x128xf32>
    %160 = tpu.matmul %159, %6, %cst_32 {dimension_numbers = #tpu.dot_dimension_numbers<[1], [0], [0], [1], [0, 0, 1, 1], [], []>} : vector<8x32xbf16>, vector<32x128xbf16>, vector<8x128xf32> -> vector<8x128xf32>
    %161 = arith.addf %158, %160 : vector<8x128xf32>
    %162 = tpu.concatenate %144, %157 in 1 : vector<8x32xf32>, vector<8x32xf32> -> vector<8x64xf32>
    %163 = arith.truncf %162 : vector<8x64xf32> to vector<8x64xbf16>
    %cst_33 = arith.constant dense<0.000000e+00> : vector<8x128xf32>
    %164 = tpu.matmul %163, %7, %cst_33 {dimension_numbers = #tpu.dot_dimension_numbers<[1], [0], [0], [1], [0, 0, 1, 1], [], []>} : vector<8x64xbf16>, vector<64x128xbf16>, vector<8x128xf32> -> vector<8x128xf32>
    %165 = arith.addf %10, %164 : vector<8x128xf32>
    %166 = arith.mulf %161, %19 : vector<8x128xf32>
    %167 = math.tanh %166 : vector<8x128xf32>
    %168 = arith.mulf %167, %19 : vector<8x128xf32>
    %169 = arith.addf %168, %22 : vector<8x128xf32>
    %170 = vector.extract_strided_slice %169 {offsets = [0, 0], sizes = [8, 32], strides = [1, 1]} : vector<8x128xf32> to vector<8x32xf32>
    %171 = vector.extract_strided_slice %169 {offsets = [0, 32], sizes = [8, 32], strides = [1, 1]} : vector<8x128xf32> to vector<8x32xf32>
    %172 = vector.extract_strided_slice %169 {offsets = [0, 64], sizes = [8, 32], strides = [1, 1]} : vector<8x128xf32> to vector<8x32xf32>
    %173 = vector.extract_strided_slice %169 {offsets = [0, 96], sizes = [8, 32], strides = [1, 1]} : vector<8x128xf32> to vector<8x32xf32>
    %174 = arith.mulf %171, %142 : vector<8x32xf32>
    %175 = arith.mulf %170, %172 : vector<8x32xf32>
    %176 = arith.addf %174, %175 : vector<8x32xf32>
    %177 = math.tanh %176 : vector<8x32xf32>
    %178 = arith.mulf %173, %177 : vector<8x32xf32>
    %179 = arith.mulf %165, %31 : vector<8x128xf32>
    %180 = math.tanh %179 : vector<8x128xf32>
    %181 = arith.mulf %180, %31 : vector<8x128xf32>
    %182 = arith.addf %181, %34 : vector<8x128xf32>
    %183 = vector.extract_strided_slice %182 {offsets = [0, 0], sizes = [8, 32], strides = [1, 1]} : vector<8x128xf32> to vector<8x32xf32>
    %184 = vector.extract_strided_slice %182 {offsets = [0, 32], sizes = [8, 32], strides = [1, 1]} : vector<8x128xf32> to vector<8x32xf32>
    %185 = vector.extract_strided_slice %182 {offsets = [0, 64], sizes = [8, 32], strides = [1, 1]} : vector<8x128xf32> to vector<8x32xf32>
    %186 = vector.extract_strided_slice %182 {offsets = [0, 96], sizes = [8, 32], strides = [1, 1]} : vector<8x128xf32> to vector<8x32xf32>
    %187 = arith.mulf %184, %155 : vector<8x32xf32>
    %188 = arith.mulf %183, %185 : vector<8x32xf32>
    %189 = arith.addf %187, %188 : vector<8x32xf32>
    %190 = math.tanh %189 : vector<8x32xf32>
    %191 = arith.mulf %186, %190 : vector<8x32xf32>
    %192 = vector.extract_strided_slice %5 {offsets = [40, 0], sizes = [8, 128], strides = [1, 1]} : vector<64x128xf32> to vector<8x128xf32>
    %193 = arith.truncf %178 : vector<8x32xf32> to vector<8x32xbf16>
    %cst_34 = arith.constant dense<0.000000e+00> : vector<8x128xf32>
    %194 = tpu.matmul %193, %6, %cst_34 {dimension_numbers = #tpu.dot_dimension_numbers<[1], [0], [0], [1], [0, 0, 1, 1], [], []>} : vector<8x32xbf16>, vector<32x128xbf16>, vector<8x128xf32> -> vector<8x128xf32>
    %195 = arith.addf %192, %194 : vector<8x128xf32>
    %196 = tpu.concatenate %178, %191 in 1 : vector<8x32xf32>, vector<8x32xf32> -> vector<8x64xf32>
    %197 = arith.truncf %196 : vector<8x64xf32> to vector<8x64xbf16>
    %cst_35 = arith.constant dense<0.000000e+00> : vector<8x128xf32>
    %198 = tpu.matmul %197, %7, %cst_35 {dimension_numbers = #tpu.dot_dimension_numbers<[1], [0], [0], [1], [0, 0, 1, 1], [], []>} : vector<8x64xbf16>, vector<64x128xbf16>, vector<8x128xf32> -> vector<8x128xf32>
    %199 = arith.addf %10, %198 : vector<8x128xf32>
    %200 = arith.mulf %195, %19 : vector<8x128xf32>
    %201 = math.tanh %200 : vector<8x128xf32>
    %202 = arith.mulf %201, %19 : vector<8x128xf32>
    %203 = arith.addf %202, %22 : vector<8x128xf32>
    %204 = vector.extract_strided_slice %203 {offsets = [0, 0], sizes = [8, 32], strides = [1, 1]} : vector<8x128xf32> to vector<8x32xf32>
    %205 = vector.extract_strided_slice %203 {offsets = [0, 32], sizes = [8, 32], strides = [1, 1]} : vector<8x128xf32> to vector<8x32xf32>
    %206 = vector.extract_strided_slice %203 {offsets = [0, 64], sizes = [8, 32], strides = [1, 1]} : vector<8x128xf32> to vector<8x32xf32>
    %207 = vector.extract_strided_slice %203 {offsets = [0, 96], sizes = [8, 32], strides = [1, 1]} : vector<8x128xf32> to vector<8x32xf32>
    %208 = arith.mulf %205, %176 : vector<8x32xf32>
    %209 = arith.mulf %204, %206 : vector<8x32xf32>
    %210 = arith.addf %208, %209 : vector<8x32xf32>
    %211 = math.tanh %210 : vector<8x32xf32>
    %212 = arith.mulf %207, %211 : vector<8x32xf32>
    %213 = arith.mulf %199, %31 : vector<8x128xf32>
    %214 = math.tanh %213 : vector<8x128xf32>
    %215 = arith.mulf %214, %31 : vector<8x128xf32>
    %216 = arith.addf %215, %34 : vector<8x128xf32>
    %217 = vector.extract_strided_slice %216 {offsets = [0, 0], sizes = [8, 32], strides = [1, 1]} : vector<8x128xf32> to vector<8x32xf32>
    %218 = vector.extract_strided_slice %216 {offsets = [0, 32], sizes = [8, 32], strides = [1, 1]} : vector<8x128xf32> to vector<8x32xf32>
    %219 = vector.extract_strided_slice %216 {offsets = [0, 64], sizes = [8, 32], strides = [1, 1]} : vector<8x128xf32> to vector<8x32xf32>
    %220 = vector.extract_strided_slice %216 {offsets = [0, 96], sizes = [8, 32], strides = [1, 1]} : vector<8x128xf32> to vector<8x32xf32>
    %221 = arith.mulf %218, %189 : vector<8x32xf32>
    %222 = arith.mulf %217, %219 : vector<8x32xf32>
    %223 = arith.addf %221, %222 : vector<8x32xf32>
    %224 = math.tanh %223 : vector<8x32xf32>
    %225 = arith.mulf %220, %224 : vector<8x32xf32>
    %226 = vector.extract_strided_slice %5 {offsets = [48, 0], sizes = [8, 128], strides = [1, 1]} : vector<64x128xf32> to vector<8x128xf32>
    %227 = arith.truncf %212 : vector<8x32xf32> to vector<8x32xbf16>
    %cst_36 = arith.constant dense<0.000000e+00> : vector<8x128xf32>
    %228 = tpu.matmul %227, %6, %cst_36 {dimension_numbers = #tpu.dot_dimension_numbers<[1], [0], [0], [1], [0, 0, 1, 1], [], []>} : vector<8x32xbf16>, vector<32x128xbf16>, vector<8x128xf32> -> vector<8x128xf32>
    %229 = arith.addf %226, %228 : vector<8x128xf32>
    %230 = tpu.concatenate %212, %225 in 1 : vector<8x32xf32>, vector<8x32xf32> -> vector<8x64xf32>
    %231 = arith.truncf %230 : vector<8x64xf32> to vector<8x64xbf16>
    %cst_37 = arith.constant dense<0.000000e+00> : vector<8x128xf32>
    %232 = tpu.matmul %231, %7, %cst_37 {dimension_numbers = #tpu.dot_dimension_numbers<[1], [0], [0], [1], [0, 0, 1, 1], [], []>} : vector<8x64xbf16>, vector<64x128xbf16>, vector<8x128xf32> -> vector<8x128xf32>
    %233 = arith.addf %10, %232 : vector<8x128xf32>
    %234 = arith.mulf %229, %19 : vector<8x128xf32>
    %235 = math.tanh %234 : vector<8x128xf32>
    %236 = arith.mulf %235, %19 : vector<8x128xf32>
    %237 = arith.addf %236, %22 : vector<8x128xf32>
    %238 = vector.extract_strided_slice %237 {offsets = [0, 0], sizes = [8, 32], strides = [1, 1]} : vector<8x128xf32> to vector<8x32xf32>
    %239 = vector.extract_strided_slice %237 {offsets = [0, 32], sizes = [8, 32], strides = [1, 1]} : vector<8x128xf32> to vector<8x32xf32>
    %240 = vector.extract_strided_slice %237 {offsets = [0, 64], sizes = [8, 32], strides = [1, 1]} : vector<8x128xf32> to vector<8x32xf32>
    %241 = vector.extract_strided_slice %237 {offsets = [0, 96], sizes = [8, 32], strides = [1, 1]} : vector<8x128xf32> to vector<8x32xf32>
    %242 = arith.mulf %239, %210 : vector<8x32xf32>
    %243 = arith.mulf %238, %240 : vector<8x32xf32>
    %244 = arith.addf %242, %243 : vector<8x32xf32>
    %245 = math.tanh %244 : vector<8x32xf32>
    %246 = arith.mulf %241, %245 : vector<8x32xf32>
    %247 = arith.mulf %233, %31 : vector<8x128xf32>
    %248 = math.tanh %247 : vector<8x128xf32>
    %249 = arith.mulf %248, %31 : vector<8x128xf32>
    %250 = arith.addf %249, %34 : vector<8x128xf32>
    %251 = vector.extract_strided_slice %250 {offsets = [0, 0], sizes = [8, 32], strides = [1, 1]} : vector<8x128xf32> to vector<8x32xf32>
    %252 = vector.extract_strided_slice %250 {offsets = [0, 32], sizes = [8, 32], strides = [1, 1]} : vector<8x128xf32> to vector<8x32xf32>
    %253 = vector.extract_strided_slice %250 {offsets = [0, 64], sizes = [8, 32], strides = [1, 1]} : vector<8x128xf32> to vector<8x32xf32>
    %254 = vector.extract_strided_slice %250 {offsets = [0, 96], sizes = [8, 32], strides = [1, 1]} : vector<8x128xf32> to vector<8x32xf32>
    %255 = arith.mulf %252, %223 : vector<8x32xf32>
    %256 = arith.mulf %251, %253 : vector<8x32xf32>
    %257 = arith.addf %255, %256 : vector<8x32xf32>
    %258 = math.tanh %257 : vector<8x32xf32>
    %259 = arith.mulf %254, %258 : vector<8x32xf32>
    %260 = vector.extract_strided_slice %5 {offsets = [56, 0], sizes = [8, 128], strides = [1, 1]} : vector<64x128xf32> to vector<8x128xf32>
    %261 = arith.truncf %246 : vector<8x32xf32> to vector<8x32xbf16>
    %cst_38 = arith.constant dense<0.000000e+00> : vector<8x128xf32>
    %262 = tpu.matmul %261, %6, %cst_38 {dimension_numbers = #tpu.dot_dimension_numbers<[1], [0], [0], [1], [0, 0, 1, 1], [], []>} : vector<8x32xbf16>, vector<32x128xbf16>, vector<8x128xf32> -> vector<8x128xf32>
    %263 = arith.addf %260, %262 : vector<8x128xf32>
    %264 = tpu.concatenate %246, %259 in 1 : vector<8x32xf32>, vector<8x32xf32> -> vector<8x64xf32>
    %265 = arith.truncf %264 : vector<8x64xf32> to vector<8x64xbf16>
    %cst_39 = arith.constant dense<0.000000e+00> : vector<8x128xf32>
    %266 = tpu.matmul %265, %7, %cst_39 {dimension_numbers = #tpu.dot_dimension_numbers<[1], [0], [0], [1], [0, 0, 1, 1], [], []>} : vector<8x64xbf16>, vector<64x128xbf16>, vector<8x128xf32> -> vector<8x128xf32>
    %267 = arith.addf %10, %266 : vector<8x128xf32>
    %268 = arith.mulf %263, %19 : vector<8x128xf32>
    %269 = math.tanh %268 : vector<8x128xf32>
    %270 = arith.mulf %269, %19 : vector<8x128xf32>
    %271 = arith.addf %270, %22 : vector<8x128xf32>
    %272 = vector.extract_strided_slice %271 {offsets = [0, 0], sizes = [8, 32], strides = [1, 1]} : vector<8x128xf32> to vector<8x32xf32>
    %273 = vector.extract_strided_slice %271 {offsets = [0, 32], sizes = [8, 32], strides = [1, 1]} : vector<8x128xf32> to vector<8x32xf32>
    %274 = vector.extract_strided_slice %271 {offsets = [0, 64], sizes = [8, 32], strides = [1, 1]} : vector<8x128xf32> to vector<8x32xf32>
    %275 = vector.extract_strided_slice %271 {offsets = [0, 96], sizes = [8, 32], strides = [1, 1]} : vector<8x128xf32> to vector<8x32xf32>
    %276 = arith.mulf %273, %244 : vector<8x32xf32>
    %277 = arith.mulf %272, %274 : vector<8x32xf32>
    %278 = arith.addf %276, %277 : vector<8x32xf32>
    %279 = math.tanh %278 : vector<8x32xf32>
    %280 = arith.mulf %275, %279 : vector<8x32xf32>
    %281 = arith.mulf %267, %31 : vector<8x128xf32>
    %282 = math.tanh %281 : vector<8x128xf32>
    %283 = arith.mulf %282, %31 : vector<8x128xf32>
    %284 = arith.addf %283, %34 : vector<8x128xf32>
    %285 = vector.extract_strided_slice %284 {offsets = [0, 0], sizes = [8, 32], strides = [1, 1]} : vector<8x128xf32> to vector<8x32xf32>
    %286 = vector.extract_strided_slice %284 {offsets = [0, 32], sizes = [8, 32], strides = [1, 1]} : vector<8x128xf32> to vector<8x32xf32>
    %287 = vector.extract_strided_slice %284 {offsets = [0, 64], sizes = [8, 32], strides = [1, 1]} : vector<8x128xf32> to vector<8x32xf32>
    %288 = vector.extract_strided_slice %284 {offsets = [0, 96], sizes = [8, 32], strides = [1, 1]} : vector<8x128xf32> to vector<8x32xf32>
    %289 = arith.mulf %286, %257 : vector<8x32xf32>
    %290 = arith.mulf %285, %287 : vector<8x32xf32>
    %291 = arith.addf %289, %290 : vector<8x32xf32>
    %292 = math.tanh %291 : vector<8x32xf32>
    %293 = arith.mulf %288, %292 : vector<8x32xf32>
    %294 = tpu.concatenate %280, %293 in 1 : vector<8x32xf32>, vector<8x32xf32> -> vector<8x64xf32>
    %295 = arith.truncf %294 : vector<8x64xf32> to vector<8x64xbf16>
    %cst_40 = arith.constant dense<0.000000e+00> : vector<8x128xf32>
    %296 = tpu.matmul %295, %7, %cst_40 {dimension_numbers = #tpu.dot_dimension_numbers<[1], [0], [0], [1], [0, 0, 1, 1], [], []>} : vector<8x64xbf16>, vector<64x128xbf16>, vector<8x128xf32> -> vector<8x128xf32>
    %297 = arith.addf %10, %296 : vector<8x128xf32>
    %298 = arith.mulf %297, %31 : vector<8x128xf32>
    %299 = math.tanh %298 : vector<8x128xf32>
    %300 = arith.mulf %299, %31 : vector<8x128xf32>
    %301 = arith.addf %300, %34 : vector<8x128xf32>
    %302 = vector.extract_strided_slice %301 {offsets = [0, 0], sizes = [8, 32], strides = [1, 1]} : vector<8x128xf32> to vector<8x32xf32>
    %303 = vector.extract_strided_slice %301 {offsets = [0, 32], sizes = [8, 32], strides = [1, 1]} : vector<8x128xf32> to vector<8x32xf32>
    %304 = vector.extract_strided_slice %301 {offsets = [0, 64], sizes = [8, 32], strides = [1, 1]} : vector<8x128xf32> to vector<8x32xf32>
    %305 = vector.extract_strided_slice %301 {offsets = [0, 96], sizes = [8, 32], strides = [1, 1]} : vector<8x128xf32> to vector<8x32xf32>
    %306 = arith.mulf %303, %291 : vector<8x32xf32>
    %307 = arith.mulf %302, %304 : vector<8x32xf32>
    %308 = arith.addf %306, %307 : vector<8x32xf32>
    %309 = math.tanh %308 : vector<8x32xf32>
    %310 = arith.mulf %305, %309 : vector<8x32xf32>
    %311 = arith.truncf %310 : vector<8x32xf32> to vector<8x32xbf16>
    %c0_41 = arith.constant 0 : index
    %c0_42 = arith.constant 0 : index
    %312 = vector.load %arg6[%c0_41, %c0_42] : memref<32x128xbf16, #tpu.memory_space<vmem>>, vector<32x128xbf16>
    %cst_43 = arith.constant dense<0.000000e+00> : vector<8x128xf32>
    %313 = tpu.matmul %311, %312, %cst_43 {dimension_numbers = #tpu.dot_dimension_numbers<[1], [0], [0], [1], [0, 0, 1, 1], [], []>} : vector<8x32xbf16>, vector<32x128xbf16>, vector<8x128xf32> -> vector<8x128xf32>
    %c0_44 = arith.constant 0 : index
    %c0_45 = arith.constant 0 : index
    %314 = vector.load %arg7[%c0_44, %c0_45] : memref<1x128xf32, #tpu.memory_space<vmem>>, vector<1x128xf32>
    %315 = vector.broadcast %314 : vector<1x128xf32> to vector<8x128xf32>
    %316 = arith.addf %313, %315 : vector<8x128xf32>
    %c0_46 = arith.constant 0 : index
    %c0_47 = arith.constant 0 : index
    %317 = vector.load %arg8[%c0_46, %c0_47] : memref<8x128xf32, #tpu.memory_space<vmem>>, vector<8x128xf32>
    tpu.vector_store %arg8[%c0_46, %c0_47], %316 {strides = array<i32>} : memref<8x128xf32, #tpu.memory_space<vmem>>, vector<8x128xf32>,
    return
  }
}

</mosaic_0001>

<llo_original>
// kernel: _lstmv2_forward_impl.1
$region0: #{_lstmv2_forward_impl.1}
  #allocation0 [shape = 'u32[]', space=smem, size = 0x4, offset = 0x4, fixed_abs, tag = 'smem constant byte address 0x4 - core index']
  #allocation1 [shape = 'u32[144,128]{1,0:T(1,128)}', space=vmem, size = 0x12000, scoped, tag = 'internal scratch']
  %s0 = inlined_call_operand.vmem [shape: bf16[64,24], index: 0, kind: input, shape index: {}]
  %s1 = inlined_call_operand.vmem [shape: bf16[24,128], index: 1, kind: input, shape index: {}]
  %s2 = inlined_call_operand.vmem [shape: bf16[32,128], index: 2, kind: input, shape index: {}]
  %s3 = inlined_call_operand.vmem [shape: f32[1,128], index: 3, kind: input, shape index: {}]
  %s4 = inlined_call_operand.vmem [shape: bf16[64,128], index: 4, kind: input, shape index: {}]
  %s5 = inlined_call_operand.vmem [shape: f32[1,128], index: 5, kind: input, shape index: {}]
  %s6 = inlined_call_operand.vmem [shape: bf16[32,128], index: 6, kind: input, shape index: {}]
  %s7 = inlined_call_operand.vmem [shape: f32[1,128], index: 7, kind: input, shape index: {}]
  %s8 = inlined_call_operand.vmem [shape: f32[8,128], index: 8, kind: output, shape index: {}]
  %s9 = sld [smem:[#allocation0]]
  $region42: #{_lstmv2_forward_impl.1} parent=0
    _
  %s11 = ssub.s32 1, %s9
  %s12 = scalar_select 0, %s11, %s9
  // Predicated region
  $region2: #{_lstmv2_forward_impl.1} parent=0 // pred_check
    _
  $region3: #{_lstmv2_forward_impl.1} parent=0 // pred_check_branch
    %14 = sbr.rel (0) target = $region5
  $region4: #{_lstmv2_forward_impl.1} parent=0 // pred_region
    _
  $region5: #{_lstmv2_forward_impl.1} parent=0 // pred_fallthru
    _
  // Predicated region
  $region6: #{_lstmv2_forward_impl.1} parent=0 // pred_check
    _
  $region7: #{_lstmv2_forward_impl.1} parent=0 // pred_check_branch
    %16 = sbr.rel (0) target = $region9
  $region8: #{_lstmv2_forward_impl.1} parent=0 // pred_region
    _
  $region9: #{_lstmv2_forward_impl.1} parent=0 // pred_fallthru
    _
  // Predicated region
  $region10: #{_lstmv2_forward_impl.1} parent=0 // pred_check
    _
  $region11: #{_lstmv2_forward_impl.1} parent=0 // pred_check_branch
    %18 = sbr.rel (0) target = $region13
  $region12: #{_lstmv2_forward_impl.1} parent=0 // pred_region
    _
  $region13: #{_lstmv2_forward_impl.1} parent=0 // pred_fallthru
    _
  // Predicated region
  $region14: #{_lstmv2_forward_impl.1} parent=0 // pred_check
    _
  $region15: #{_lstmv2_forward_impl.1} parent=0 // pred_check_branch
    %20 = sbr.rel (0) target = $region17
  $region16: #{_lstmv2_forward_impl.1} parent=0 // pred_region
    _
  $region17: #{_lstmv2_forward_impl.1} parent=0 // pred_fallthru
    _
  // Predicated region
  $region18: #{_lstmv2_forward_impl.1} parent=0 // pred_check
    _
  $region19: #{_lstmv2_forward_impl.1} parent=0 // pred_check_branch
    %22 = sbr.rel (0) target = $region21
  $region20: #{_lstmv2_forward_impl.1} parent=0 // pred_region
    _
  $region21: #{_lstmv2_forward_impl.1} parent=0 // pred_fallthru
    _
  // Predicated region
  $region22: #{_lstmv2_forward_impl.1} parent=0 // pred_check
    _
  $region23: #{_lstmv2_forward_impl.1} parent=0 // pred_check_branch
    %24 = sbr.rel (0) target = $region25
  $region24: #{_lstmv2_forward_impl.1} parent=0 // pred_region
    _
  $region25: #{_lstmv2_forward_impl.1} parent=0 // pred_fallthru
    _
  // Predicated region
  $region26: #{_lstmv2_forward_impl.1} parent=0 // pred_check
    _
  $region27: #{_lstmv2_forward_impl.1} parent=0 // pred_check_branch
    %26 = sbr.rel (0) target = $region29
  $region28: #{_lstmv2_forward_impl.1} parent=0 // pred_region
    _
  $region29: #{_lstmv2_forward_impl.1} parent=0 // pred_fallthru
    _
  // Predicated region
  $region30: #{_lstmv2_forward_impl.1} parent=0 // pred_check
    _
  $region31: #{_lstmv2_forward_impl.1} parent=0 // pred_check_branch
    %28 = sbr.rel (0) target = $region33
  $region32: #{_lstmv2_forward_impl.1} parent=0 // pred_region
    _
  $region33: #{_lstmv2_forward_impl.1} parent=0 // pred_fallthru
    _
  %v30 = vld [vmem:[%s0] sm:$0xf]
  %v31 = vld [vmem:[%s0 + $0x4] sm:$0xf]
  %v32 = vld [vmem:[%s0 + $0x8] sm:$0xf]
  %v33 = vld [vmem:[%s0 + $0xc] sm:$0xf]
  %v34 = vld [vmem:[%s0 + $0x10] sm:$0xf]
  %v35 = vld [vmem:[%s0 + $0x14] sm:$0xf]
  %v36 = vld [vmem:[%s0 + $0x18] sm:$0xf]
  %v37 = vld [vmem:[%s0 + $0x1c] sm:$0xf]
  %v38 = vld [vmem:[%s1] sm:$0xf]
  %v39 = vld [vmem:[%s1 + $0x4] sm:$0xf]
  %v40 = vld [vmem:[%s1 + $0x8] sm:$0xf]
  %v41 = vld [vmem:[%s3] sm:$0x1]
  %v43 = vlaneseq
  %v44 = vshrl.u32 %v43, 7
  %v45 = vsub.s32 0, %v44
  %v46 = vrot.slane %v41, %v45
  %v56 = vunpack.c.l.b16 %v30
  %v57 = vunpack.c.l.b16 %v31
  %v58 = vunpack.c.l.b16 %v32
  %v59 = vunpack.c.l.b16 %v33
  %v60 = vunpack.c.l.b16 %v34
  %v61 = vunpack.c.l.b16 %v35
  %v62 = vunpack.c.l.b16 %v36
  %v63 = vunpack.c.l.b16 %v37
  %v64 = vpack.c.b16 %v57, %v56
  %v65 = vpack.c.b16 %v59, %v58
  %v66 = vpack.c.b16 %v61, %v60
  %v67 = vpack.c.b16 %v63, %v62
  %v71 = vunpack.c.l.b16 %v38
  %v72 = vunpack.c.l.b16 %v39
  %v73 = vunpack.c.l.b16 %v40
  %v74 = vpack.c.b16 %v72, %v71
  %v75 = vpack.c.b16 %v73, %v73
  %vm77 = vcmask 195584
  %v79 = vsel %vm77, %v64, 0
  %v82 = vsel %vm77, %v65, 0
  %v85 = vsel %vm77, %v66, 0
  %v88 = vsel %vm77, %v67, 0
  %vm90 = vcmask 1043456
  %v92 = vsel %vm90, %v75, 0
  %94 = vmatprep.subr.bf16.mxu0 0
  %95 = vmatpush1.bf16.msra.mxu0 0
  %96 = vmatprep.subr.bf16.mxu0 0
  %97 = vmatpush1.bf16.msra.mxu0 0
  %98 = vmatprep.subr.bf16.mxu0 0
  %99 = vmatpush1.bf16.msra.mxu0 0
  %100 = vmatprep.subr.bf16.mxu0 0
  %101 = vmatpush1.bf16.msra.mxu0 0
  %102 = vmatprep.subr.bf16.mxu0 0
  %103 = vmatpush1.bf16.msra.mxu0 0
  %104 = vmatprep.subr.bf16.mxu0 0
  %105 = vmatpush1.bf16.msra.mxu0 0
  %106 = vmatprep.subr.bf16.mxu0 0
  %107 = vmatpush1.bf16.msra.mxu0 %v92
  %108 = vmatprep.subr.bf16.mxu0 0
  %109 = vmatpush1.bf16.msra.mxu0 %v74
  %110 = vmatprep.subr.bf16.mxu0 0
  %111 = vmatpush2.bf16.msra.mxu0 0
  %112 = vmatprep.subr.bf16.mxu0 0
  %113 = vmatpush2.bf16.msra.mxu0 0
  %114 = vmatprep.subr.bf16.mxu0 0
  %115 = vmatpush2.bf16.msra.mxu0 0
  %116 = vmatprep.subr.bf16.mxu0 0
  %117 = vmatpush2.bf16.msra.mxu0 0
  %118 = vmatprep.subr.bf16.mxu0 0
  %119 = vmatpush2.bf16.msra.mxu0 0
  %120 = vmatprep.subr.bf16.mxu0 0
  %121 = vmatpush2.bf16.msra.mxu0 0
  %122 = vmatprep.subr.bf16.mxu0 0
  %123 = vmatpush2.bf16.msra.mxu0 0
  %124 = vmatprep.subr.bf16.mxu0 0
  %125 = vmatpush2.bf16.msra.mxu0 0
  %126 = vmatprep.mubr.bf16.mxu0 0
  %127 = vmatmul.mubr.bf16.gmra.mxu0 %v79
  %v128 = vpop.f32.mrf.mxu0
  %v129 = vadd.f32 %v46, %v128
  %v130 = vpop.f32.mrf.mxu0
  %v131 = vpop.f32.mrf.mxu0
  %v132 = vadd.f32 %v46, %v131
  %v133 = vpop.f32.mrf.mxu0
  %134 = vmatprep.mubr.bf16.mxu0 0
  %135 = vmatmul.mubr.bf16.gmra.mxu0 %v82
  %v136 = vpop.f32.mrf.mxu0
  %v137 = vadd.f32 %v46, %v136
  %v138 = vpop.f32.mrf.mxu0
  %v139 = vpop.f32.mrf.mxu0
  %v140 = vadd.f32 %v46, %v139
  %v141 = vpop.f32.mrf.mxu0
  %142 = vmatprep.mubr.bf16.mxu0 0
  %143 = vmatmul.mubr.bf16.gmra.mxu0 %v85
  %v144 = vpop.f32.mrf.mxu0
  %v145 = vadd.f32 %v46, %v144
  %v146 = vpop.f32.mrf.mxu0
  %v147 = vpop.f32.mrf.mxu0
  %v148 = vadd.f32 %v46, %v147
  %v149 = vpop.f32.mrf.mxu0
  %150 = vmatprep.mubr.bf16.mxu0 0
  %151 = vmatmul.mubr.bf16.gmra.mxu0 %v88
  %v152 = vpop.f32.mrf.mxu0
  %v153 = vadd.f32 %v46, %v152
  %v154 = vpop.f32.mrf.mxu0
  %v155 = vpop.f32.mrf.mxu0
  %v156 = vadd.f32 %v46, %v155
  %v157 = vpop.f32.mrf.mxu0
  %158 = vdwg.mxu0
  %v159 = vld [vmem:[%s2] sm:$0xf]
  %v160 = vld [vmem:[%s2 + $0x4] sm:$0xf]
  %v161 = vld [vmem:[%s2 + $0x8] sm:$0xf]
  %v162 = vld [vmem:[%s2 + $0xc] sm:$0xf]
  %v163 = vld [vmem:[%s4] sm:$0xf]
  %v164 = vld [vmem:[%s4 + $0x4] sm:$0xf]
  %v165 = vld [vmem:[%s4 + $0x8] sm:$0xf]
  %v166 = vld [vmem:[%s4 + $0xc] sm:$0xf]
  %v167 = vld [vmem:[%s4 + $0x10] sm:$0xf]
  %v168 = vld [vmem:[%s4 + $0x14] sm:$0xf]
  %v169 = vld [vmem:[%s4 + $0x18] sm:$0xf]
  %v170 = vld [vmem:[%s4 + $0x1c] sm:$0xf]
  %v171 = vld [vmem:[%s5] sm:$0x1]
  %v173 = vlaneseq
  %v174 = vshrl.u32 %v173, 7
  %v175 = vsub.s32 0, %v174
  %v176 = vrot.slane %v171, %v175
  %v178 = vlaneseq
  %v179 = vand.u32 %v178, 127
  %vm180 = vcmp.ge.s32.totalorder %v179, 64
  %vm181 = vcmp.lt.s32.totalorder %v179, 96
  %vm182 = vmand %vm180, %vm181
  %v183 = vsel %vm182, 1.0, 0.5
  %v184 = vsel %vm182, 0.0, 0.5
  %v189 = vunpack.c.l.b16 %v159
  %v190 = vunpack.c.l.b16 %v160
  %v191 = vunpack.c.l.b16 %v161
  %v192 = vunpack.c.l.b16 %v162
  %v193 = vpack.c.b16 %v190, %v189
  %v194 = vpack.c.b16 %v192, %v191
  %vm197 = vcmask 261120
  %v199 = vsel %vm197, 0, 0
  %201 = vmatprep.subr.bf16.mxu0 0
  %202 = vmatpush1.bf16.msra.mxu0 0
  %203 = vmatprep.subr.bf16.mxu0 0
  %204 = vmatpush1.bf16.msra.mxu0 0
  %205 = vmatprep.subr.bf16.mxu0 0
  %206 = vmatpush1.bf16.msra.mxu0 0
  %207 = vmatprep.subr.bf16.mxu0 0
  %208 = vmatpush1.bf16.msra.mxu0 0
  %209 = vmatprep.subr.bf16.mxu0 0
  %210 = vmatpush1.bf16.msra.mxu0 0
  %211 = vmatprep.subr.bf16.mxu0 0
  %212 = vmatpush1.bf16.msra.mxu0 0
  %213 = vmatprep.subr.bf16.mxu0 0
  %214 = vmatpush1.bf16.msra.mxu0 %v194
  %215 = vmatprep.subr.bf16.mxu0 0
  %216 = vmatpush1.bf16.msra.mxu0 %v193
  %217 = vmatprep.subr.bf16.mxu0 0
  %218 = vmatpush2.bf16.msra.mxu0 0
  %219 = vmatprep.subr.bf16.mxu0 0
  %220 = vmatpush2.bf16.msra.mxu0 0
  %221 = vmatprep.subr.bf16.mxu0 0
  %222 = vmatpush2.bf16.msra.mxu0 0
  %223 = vmatprep.subr.bf16.mxu0 0
  %224 = vmatpush2.bf16.msra.mxu0 0
  %225 = vmatprep.subr.bf16.mxu0 0
  %226 = vmatpush2.bf16.msra.mxu0 0
  %227 = vmatprep.subr.bf16.mxu0 0
  %228 = vmatpush2.bf16.msra.mxu0 0
  %229 = vmatprep.subr.bf16.mxu0 0
  %230 = vmatpush2.bf16.msra.mxu0 0
  %231 = vmatprep.subr.bf16.mxu0 0
  %232 = vmatpush2.bf16.msra.mxu0 0
  %233 = vmatprep.mubr.bf16.mxu0 0
  %234 = vmatmul.mubr.bf16.gmra.mxu0 %v199
  %v235 = vpop.f32.mrf.mxu0
  %v236 = vadd.f32 0.0, %v235
  %v237 = vpop.f32.mrf.mxu0
  %v238 = vpop.f32.mrf.mxu0
  %v239 = vpop.f32.mrf.mxu0
  %240 = vdwg.mxu0
  %v241 = vadd.f32 %v129, %v236
  %v242 = vmul.f32 %v241, %v183
  %v243 = vtanh.pop %v242
  %v244 = vmul.f32 %v243, %v183
  %v245 = vadd.f32 %v244, %v184
  %v246 = vmul.f32 %v245, 0.0
  %248 = vrot.lane.b32.xlu0 %v245, 64
  %v249 = vpop.permute.xlu0 %248
  %v251 = vmul.f32 %v245, %v249
  %253 = vrot.lane.b32.xlu0 %v251, 32
  %v254 = vpop.permute.xlu0 %253
  %v256 = vadd.f32 %v246, %v254
  %v257 = vtanh.pop %v256
  %259 = vrot.lane.b32.xlu0 %v257, 64
  %v260 = vpop.permute.xlu0 %259
  %v262 = vmul.f32 %v245, %v260
  %v263 = vpack.c.bf16 %v262, %v262
  %265 = vrot.lane.b32.xlu0 %v263, 32
  %v266 = vpop.permute.xlu0 %265
  %v268 = vsel %vm197, %v266, 0
  %270 = vmatprep.subr.bf16.mxu0 0
  %271 = vmatpush1.bf16.msra.mxu0 0
  %272 = vmatprep.subr.bf16.mxu0 0
  %273 = vmatpush1.bf16.msra.mxu0 0
  %274 = vmatprep.subr.bf16.mxu0 0
  %275 = vmatpush1.bf16.msra.mxu0 0
  %276 = vmatprep.subr.bf16.mxu0 0
  %277 = vmatpush1.bf16.msra.mxu0 0
  %278 = vmatprep.subr.bf16.mxu0 0
  %279 = vmatpush1.bf16.msra.mxu0 0
  %280 = vmatprep.subr.bf16.mxu0 0
  %281 = vmatpush1.bf16.msra.mxu0 0
  %282 = vmatprep.subr.bf16.mxu0 0
  %283 = vmatpush1.bf16.msra.mxu0 %v194
  %284 = vmatprep.subr.bf16.mxu0 0
  %285 = vmatpush1.bf16.msra.mxu0 %v193
  %286 = vmatprep.subr.bf16.mxu0 0
  %287 = vmatpush2.bf16.msra.mxu0 0
  %288 = vmatprep.subr.bf16.mxu0 0
  %289 = vmatpush2.bf16.msra.mxu0 0
  %290 = vmatprep.subr.bf16.mxu0 0
  %291 = vmatpush2.bf16.msra.mxu0 0
  %292 = vmatprep.subr.bf16.mxu0 0
  %293 = vmatpush2.bf16.msra.mxu0 0
  %294 = vmatprep.subr.bf16.mxu0 0
  %295 = vmatpush2.bf16.msra.mxu0 0
  %296 = vmatprep.subr.bf16.mxu0 0
  %297 = vmatpush2.bf16.msra.mxu0 0
  %298 = vmatprep.subr.bf16.mxu0 0
  %299 = vmatpush2.bf16.msra.mxu0 0
  %300 = vmatprep.subr.bf16.mxu0 0
  %301 = vmatpush2.bf16.msra.mxu0 0
  %302 = vmatprep.mubr.bf16.mxu0 0
  %303 = vmatmul.mubr.bf16.gmra.mxu0 %v268
  %v304 = vpop.f32.mrf.mxu0
  %v305 = vadd.f32 0.0, %v304
  %v306 = vpop.f32.mrf.mxu0
  %v307 = vpop.f32.mrf.mxu0
  %v308 = vpop.f32.mrf.mxu0
  %309 = vdwg.mxu0
  %v310 = vadd.f32 %v132, %v305
  %312 = vrot.lane.b32.xlu0 %v262, 32
  %v313 = vpop.permute.xlu0 %312
  %v315 = vsel %vm197, %v313, 0.0
  %v316 = vpack.c.bf16 %v315, %v315
  %v325 = vunpack.c.l.b16 %v163
  %v326 = vunpack.c.l.b16 %v164
  %v327 = vunpack.c.l.b16 %v165
  %v328 = vunpack.c.l.b16 %v166
  %v329 = vunpack.c.l.b16 %v167
  %v330 = vunpack.c.l.b16 %v168
  %v331 = vunpack.c.l.b16 %v169
  %v332 = vunpack.c.l.b16 %v170
  %v333 = vpack.c.b16 %v326, %v325
  %v334 = vpack.c.b16 %v328, %v327
  %v335 = vpack.c.b16 %v330, %v329
  %v336 = vpack.c.b16 %v332, %v331
  %vm341 = vcmask 523264
  %v343 = vsel %vm341, %v316, 0
  %345 = vmatprep.subr.bf16.mxu0 0
  %346 = vmatpush1.bf16.msra.mxu0 0
  %347 = vmatprep.subr.bf16.mxu0 0
  %348 = vmatpush1.bf16.msra.mxu0 0
  %349 = vmatprep.subr.bf16.mxu0 0
  %350 = vmatpush1.bf16.msra.mxu0 0
  %351 = vmatprep.subr.bf16.mxu0 0
  %352 = vmatpush1.bf16.msra.mxu0 0
  %353 = vmatprep.subr.bf16.mxu0 0
  %354 = vmatpush1.bf16.msra.mxu0 %v336
  %355 = vmatprep.subr.bf16.mxu0 0
  %356 = vmatpush1.bf16.msra.mxu0 %v335
  %357 = vmatprep.subr.bf16.mxu0 0
  %358 = vmatpush1.bf16.msra.mxu0 %v334
  %359 = vmatprep.subr.bf16.mxu0 0
  %360 = vmatpush1.bf16.msra.mxu0 %v333
  %361 = vmatprep.subr.bf16.mxu0 0
  %362 = vmatpush2.bf16.msra.mxu0 0
  %363 = vmatprep.subr.bf16.mxu0 0
  %364 = vmatpush2.bf16.msra.mxu0 0
  %365 = vmatprep.subr.bf16.mxu0 0
  %366 = vmatpush2.bf16.msra.mxu0 0
  %367 = vmatprep.subr.bf16.mxu0 0
  %368 = vmatpush2.bf16.msra.mxu0 0
  %369 = vmatprep.subr.bf16.mxu0 0
  %370 = vmatpush2.bf16.msra.mxu0 0
  %371 = vmatprep.subr.bf16.mxu0 0
  %372 = vmatpush2.bf16.msra.mxu0 0
  %373 = vmatprep.subr.bf16.mxu0 0
  %374 = vmatpush2.bf16.msra.mxu0 0
  %375 = vmatprep.subr.bf16.mxu0 0
  %376 = vmatpush2.bf16.msra.mxu0 0
  %377 = vmatprep.mubr.bf16.mxu0 0
  %378 = vmatmul.mubr.bf16.gmra.mxu0 %v343
  %v379 = vpop.f32.mrf.mxu0
  %v380 = vadd.f32 0.0, %v379
  %v381 = vpop.f32.mrf.mxu0
  %v382 = vpop.f32.mrf.mxu0
  %v383 = vpop.f32.mrf.mxu0
  %384 = vdwg.mxu0
  %v385 = vadd.f32 %v176, %v380
  %v386 = vmul.f32 %v310, %v183
  %v387 = vtanh.pop %v386
  %v388 = vmul.f32 %v387, %v183
  %v389 = vadd.f32 %v388, %v184
  %v390 = vmul.f32 %v389, %v256
  %392 = vrot.lane.b32.xlu0 %v389, 64
  %v393 = vpop.permute.xlu0 %392
  %v395 = vmul.f32 %v389, %v393
  %397 = vrot.lane.b32.xlu0 %v395, 32
  %v398 = vpop.permute.xlu0 %397
  %v400 = vadd.f32 %v390, %v398
  %v401 = vtanh.pop %v400
  %403 = vrot.lane.b32.xlu0 %v401, 64
  %v404 = vpop.permute.xlu0 %403
  %v406 = vmul.f32 %v389, %v404
  %v407 = vmul.f32 %v385, %v183
  %v408 = vtanh.pop %v407
  %v409 = vmul.f32 %v408, %v183
  %v410 = vadd.f32 %v409, %v184
  %v411 = vmul.f32 %v410, 0.0
  %413 = vrot.lane.b32.xlu0 %v410, 64
  %v414 = vpop.permute.xlu0 %413
  %v416 = vmul.f32 %v410, %v414
  %418 = vrot.lane.b32.xlu0 %v416, 32
  %v419 = vpop.permute.xlu0 %418
  %v421 = vadd.f32 %v411, %v419
  %v422 = vtanh.pop %v421
  %424 = vrot.lane.b32.xlu0 %v422, 64
  %v425 = vpop.permute.xlu0 %424
  %v427 = vmul.f32 %v410, %v425
  %v428 = vpack.c.bf16 %v406, %v406
  %430 = vrot.lane.b32.xlu0 %v428, 32
  %v431 = vpop.permute.xlu0 %430
  %v433 = vsel %vm197, %v431, 0
  %435 = vmatprep.subr.bf16.mxu0 0
  %436 = vmatpush1.bf16.msra.mxu0 0
  %437 = vmatprep.subr.bf16.mxu0 0
  %438 = vmatpush1.bf16.msra.mxu0 0
  %439 = vmatprep.subr.bf16.mxu0 0
  %440 = vmatpush1.bf16.msra.mxu0 0
  %441 = vmatprep.subr.bf16.mxu0 0
  %442 = vmatpush1.bf16.msra.mxu0 0
  %443 = vmatprep.subr.bf16.mxu0 0
  %444 = vmatpush1.bf16.msra.mxu0 0
  %445 = vmatprep.subr.bf16.mxu0 0
  %446 = vmatpush1.bf16.msra.mxu0 0
  %447 = vmatprep.subr.bf16.mxu0 0
  %448 = vmatpush1.bf16.msra.mxu0 %v194
  %449 = vmatprep.subr.bf16.mxu0 0
  %450 = vmatpush1.bf16.msra.mxu0 %v193
  %451 = vmatprep.subr.bf16.mxu0 0
  %452 = vmatpush2.bf16.msra.mxu0 0
  %453 = vmatprep.subr.bf16.mxu0 0
  %454 = vmatpush2.bf16.msra.mxu0 0
  %455 = vmatprep.subr.bf16.mxu0 0
  %456 = vmatpush2.bf16.msra.mxu0 0
  %457 = vmatprep.subr.bf16.mxu0 0
  %458 = vmatpush2.bf16.msra.mxu0 0
  %459 = vmatprep.subr.bf16.mxu0 0
  %460 = vmatpush2.bf16.msra.mxu0 0
  %461 = vmatprep.subr.bf16.mxu0 0
  %462 = vmatpush2.bf16.msra.mxu0 0
  %463 = vmatprep.subr.bf16.mxu0 0
  %464 = vmatpush2.bf16.msra.mxu0 0
  %465 = vmatprep.subr.bf16.mxu0 0
  %466 = vmatpush2.bf16.msra.mxu0 0
  %467 = vmatprep.mubr.bf16.mxu0 0
  %468 = vmatmul.mubr.bf16.gmra.mxu0 %v433
  %v469 = vpop.f32.mrf.mxu0
  %v470 = vadd.f32 0.0, %v469
  %v471 = vpop.f32.mrf.mxu0
  %v472 = vpop.f32.mrf.mxu0
  %v473 = vpop.f32.mrf.mxu0
  %474 = vdwg.mxu0
  %v475 = vadd.f32 %v137, %v470
  %477 = vrot.lane.b32.xlu0 %v406, 32
  %v478 = vpop.permute.xlu0 %477
  %481 = vrot.lane.b32.xlu0 %v427, 64
  %v482 = vpop.permute.xlu0 %481
  %v484 = vsel %vm197, %v478, %v482
  %v485 = vpack.c.bf16 %v484, %v484
  %v487 = vsel %vm341, %v485, 0
  %489 = vmatprep.subr.bf16.mxu0 0
  %490 = vmatpush1.bf16.msra.mxu0 0
  %491 = vmatprep.subr.bf16.mxu0 0
  %492 = vmatpush1.bf16.msra.mxu0 0
  %493 = vmatprep.subr.bf16.mxu0 0
  %494 = vmatpush1.bf16.msra.mxu0 0
  %495 = vmatprep.subr.bf16.mxu0 0
  %496 = vmatpush1.bf16.msra.mxu0 0
  %497 = vmatprep.subr.bf16.mxu0 0
  %498 = vmatpush1.bf16.msra.mxu0 %v336
  %499 = vmatprep.subr.bf16.mxu0 0
  %500 = vmatpush1.bf16.msra.mxu0 %v335
  %501 = vmatprep.subr.bf16.mxu0 0
  %502 = vmatpush1.bf16.msra.mxu0 %v334
  %503 = vmatprep.subr.bf16.mxu0 0
  %504 = vmatpush1.bf16.msra.mxu0 %v333
  %505 = vmatprep.subr.bf16.mxu0 0
  %506 = vmatpush2.bf16.msra.mxu0 0
  %507 = vmatprep.subr.bf16.mxu0 0
  %508 = vmatpush2.bf16.msra.mxu0 0
  %509 = vmatprep.subr.bf16.mxu0 0
  %510 = vmatpush2.bf16.msra.mxu0 0
  %511 = vmatprep.subr.bf16.mxu0 0
  %512 = vmatpush2.bf16.msra.mxu0 0
  %513 = vmatprep.subr.bf16.mxu0 0
  %514 = vmatpush2.bf16.msra.mxu0 0
  %515 = vmatprep.subr.bf16.mxu0 0
  %516 = vmatpush2.bf16.msra.mxu0 0
  %517 = vmatprep.subr.bf16.mxu0 0
  %518 = vmatpush2.bf16.msra.mxu0 0
  %519 = vmatprep.subr.bf16.mxu0 0
  %520 = vmatpush2.bf16.msra.mxu0 0
  %521 = vmatprep.mubr.bf16.mxu0 0
  %522 = vmatmul.mubr.bf16.gmra.mxu0 %v487
  %v523 = vpop.f32.mrf.mxu0
  %v524 = vadd.f32 0.0, %v523
  %v525 = vpop.f32.mrf.mxu0
  %v526 = vpop.f32.mrf.mxu0
  %v527 = vpop.f32.mrf.mxu0
  %528 = vdwg.mxu0
  %v529 = vadd.f32 %v176, %v524
  %v530 = vmul.f32 %v475, %v183
  %v531 = vtanh.pop %v530
  %v532 = vmul.f32 %v531, %v183
  %v533 = vadd.f32 %v532, %v184
  %v534 = vmul.f32 %v533, %v400
  %536 = vrot.lane.b32.xlu0 %v533, 64
  %v537 = vpop.permute.xlu0 %536
  %v539 = vmul.f32 %v533, %v537
  %541 = vrot.lane.b32.xlu0 %v539, 32
  %v542 = vpop.permute.xlu0 %541
  %v544 = vadd.f32 %v534, %v542
  %v545 = vtanh.pop %v544
  %547 = vrot.lane.b32.xlu0 %v545, 64
  %v548 = vpop.permute.xlu0 %547
  %v550 = vmul.f32 %v533, %v548
  %v551 = vmul.f32 %v529, %v183
  %v552 = vtanh.pop %v551
  %v553 = vmul.f32 %v552, %v183
  %v554 = vadd.f32 %v553, %v184
  %v555 = vmul.f32 %v554, %v421
  %557 = vrot.lane.b32.xlu0 %v554, 64
  %v558 = vpop.permute.xlu0 %557
  %v560 = vmul.f32 %v554, %v558
  %562 = vrot.lane.b32.xlu0 %v560, 32
  %v563 = vpop.permute.xlu0 %562
  %v565 = vadd.f32 %v555, %v563
  %v566 = vtanh.pop %v565
  %568 = vrot.lane.b32.xlu0 %v566, 64
  %v569 = vpop.permute.xlu0 %568
  %v571 = vmul.f32 %v554, %v569
  %v572 = vpack.c.bf16 %v550, %v550
  %574 = vrot.lane.b32.xlu0 %v572, 32
  %v575 = vpop.permute.xlu0 %574
  %v577 = vsel %vm197, %v575, 0
  %579 = vmatprep.subr.bf16.mxu0 0
  %580 = vmatpush1.bf16.msra.mxu0 0
  %581 = vmatprep.subr.bf16.mxu0 0
  %582 = vmatpush1.bf16.msra.mxu0 0
  %583 = vmatprep.subr.bf16.mxu0 0
  %584 = vmatpush1.bf16.msra.mxu0 0
  %585 = vmatprep.subr.bf16.mxu0 0
  %586 = vmatpush1.bf16.msra.mxu0 0
  %587 = vmatprep.subr.bf16.mxu0 0
  %588 = vmatpush1.bf16.msra.mxu0 0
  %589 = vmatprep.subr.bf16.mxu0 0
  %590 = vmatpush1.bf16.msra.mxu0 0
  %591 = vmatprep.subr.bf16.mxu0 0
  %592 = vmatpush1.bf16.msra.mxu0 %v194
  %593 = vmatprep.subr.bf16.mxu0 0
  %594 = vmatpush1.bf16.msra.mxu0 %v193
  %595 = vmatprep.subr.bf16.mxu0 0
  %596 = vmatpush2.bf16.msra.mxu0 0
  %597 = vmatprep.subr.bf16.mxu0 0
  %598 = vmatpush2.bf16.msra.mxu0 0
  %599 = vmatprep.subr.bf16.mxu0 0
  %600 = vmatpush2.bf16.msra.mxu0 0
  %601 = vmatprep.subr.bf16.mxu0 0
  %602 = vmatpush2.bf16.msra.mxu0 0
  %603 = vmatprep.subr.bf16.mxu0 0
  %604 = vmatpush2.bf16.msra.mxu0 0
  %605 = vmatprep.subr.bf16.mxu0 0
  %606 = vmatpush2.bf16.msra.mxu0 0
  %607 = vmatprep.subr.bf16.mxu0 0
  %608 = vmatpush2.bf16.msra.mxu0 0
  %609 = vmatprep.subr.bf16.mxu0 0
  %610 = vmatpush2.bf16.msra.mxu0 0
  %611 = vmatprep.mubr.bf16.mxu0 0
  %612 = vmatmul.mubr.bf16.gmra.mxu0 %v577
  %v613 = vpop.f32.mrf.mxu0
  %v614 = vadd.f32 0.0, %v613
  %v615 = vpop.f32.mrf.mxu0
  %v616 = vpop.f32.mrf.mxu0
  %v617 = vpop.f32.mrf.mxu0
  %618 = vdwg.mxu0
  %v619 = vadd.f32 %v140, %v614
  %621 = vrot.lane.b32.xlu0 %v550, 32
  %v622 = vpop.permute.xlu0 %621
  %625 = vrot.lane.b32.xlu0 %v571, 64
  %v626 = vpop.permute.xlu0 %625
  %v628 = vsel %vm197, %v622, %v626
  %v629 = vpack.c.bf16 %v628, %v628
  %v631 = vsel %vm341, %v629, 0
  %633 = vmatprep.subr.bf16.mxu0 0
  %634 = vmatpush1.bf16.msra.mxu0 0
  %635 = vmatprep.subr.bf16.mxu0 0
  %636 = vmatpush1.bf16.msra.mxu0 0
  %637 = vmatprep.subr.bf16.mxu0 0
  %638 = vmatpush1.bf16.msra.mxu0 0
  %639 = vmatprep.subr.bf16.mxu0 0
  %640 = vmatpush1.bf16.msra.mxu0 0
  %641 = vmatprep.subr.bf16.mxu0 0
  %642 = vmatpush1.bf16.msra.mxu0 %v336
  %643 = vmatprep.subr.bf16.mxu0 0
  %644 = vmatpush1.bf16.msra.mxu0 %v335
  %645 = vmatprep.subr.bf16.mxu0 0
  %646 = vmatpush1.bf16.msra.mxu0 %v334
  %647 = vmatprep.subr.bf16.mxu0 0
  %648 = vmatpush1.bf16.msra.mxu0 %v333
  %649 = vmatprep.subr.bf16.mxu0 0
  %650 = vmatpush2.bf16.msra.mxu0 0
  %651 = vmatprep.subr.bf16.mxu0 0
  %652 = vmatpush2.bf16.msra.mxu0 0
  %653 = vmatprep.subr.bf16.mxu0 0
  %654 = vmatpush2.bf16.msra.mxu0 0
  %655 = vmatprep.subr.bf16.mxu0 0
  %656 = vmatpush2.bf16.msra.mxu0 0
  %657 = vmatprep.subr.bf16.mxu0 0
  %658 = vmatpush2.bf16.msra.mxu0 0
  %659 = vmatprep.subr.bf16.mxu0 0
  %660 = vmatpush2.bf16.msra.mxu0 0
  %661 = vmatprep.subr.bf16.mxu0 0
  %662 = vmatpush2.bf16.msra.mxu0 0
  %663 = vmatprep.subr.bf16.mxu0 0
  %664 = vmatpush2.bf16.msra.mxu0 0
  %665 = vmatprep.mubr.bf16.mxu0 0
  %666 = vmatmul.mubr.bf16.gmra.mxu0 %v631
  %v667 = vpop.f32.mrf.mxu0
  %v668 = vadd.f32 0.0, %v667
  %v669 = vpop.f32.mrf.mxu0
  %v670 = vpop.f32.mrf.mxu0
  %v671 = vpop.f32.mrf.mxu0
  %672 = vdwg.mxu0
  %v673 = vadd.f32 %v176, %v668
  %v674 = vmul.f32 %v619, %v183
  %v675 = vtanh.pop %v674
  %v676 = vmul.f32 %v675, %v183
  %v677 = vadd.f32 %v676, %v184
  %v678 = vmul.f32 %v677, %v544
  %680 = vrot.lane.b32.xlu0 %v677, 64
  %v681 = vpop.permute.xlu0 %680
  %v683 = vmul.f32 %v677, %v681
  %685 = vrot.lane.b32.xlu0 %v683, 32
  %v686 = vpop.permute.xlu0 %685
  %v688 = vadd.f32 %v678, %v686
  %v689 = vtanh.pop %v688
  %691 = vrot.lane.b32.xlu0 %v689, 64
  %v692 = vpop.permute.xlu0 %691
  %v694 = vmul.f32 %v677, %v692
  %v695 = vmul.f32 %v673, %v183
  %v696 = vtanh.pop %v695
  %v697 = vmul.f32 %v696, %v183
  %v698 = vadd.f32 %v697, %v184
  %v699 = vmul.f32 %v698, %v565
  %701 = vrot.lane.b32.xlu0 %v698, 64
  %v702 = vpop.permute.xlu0 %701
  %v704 = vmul.f32 %v698, %v702
  %706 = vrot.lane.b32.xlu0 %v704, 32
  %v707 = vpop.permute.xlu0 %706
  %v709 = vadd.f32 %v699, %v707
  %v710 = vtanh.pop %v709
  %712 = vrot.lane.b32.xlu0 %v710, 64
  %v713 = vpop.permute.xlu0 %712
  %v715 = vmul.f32 %v698, %v713
  %v716 = vpack.c.bf16 %v694, %v694
  %718 = vrot.lane.b32.xlu0 %v716, 32
  %v719 = vpop.permute.xlu0 %718
  %v721 = vsel %vm197, %v719, 0
  %723 = vmatprep.subr.bf16.mxu0 0
  %724 = vmatpush1.bf16.msra.mxu0 0
  %725 = vmatprep.subr.bf16.mxu0 0
  %726 = vmatpush1.bf16.msra.mxu0 0
  %727 = vmatprep.subr.bf16.mxu0 0
  %728 = vmatpush1.bf16.msra.mxu0 0
  %729 = vmatprep.subr.bf16.mxu0 0
  %730 = vmatpush1.bf16.msra.mxu0 0
  %731 = vmatprep.subr.bf16.mxu0 0
  %732 = vmatpush1.bf16.msra.mxu0 0
  %733 = vmatprep.subr.bf16.mxu0 0
  %734 = vmatpush1.bf16.msra.mxu0 0
  %735 = vmatprep.subr.bf16.mxu0 0
  %736 = vmatpush1.bf16.msra.mxu0 %v194
  %737 = vmatprep.subr.bf16.mxu0 0
  %738 = vmatpush1.bf16.msra.mxu0 %v193
  %739 = vmatprep.subr.bf16.mxu0 0
  %740 = vmatpush2.bf16.msra.mxu0 0
  %741 = vmatprep.subr.bf16.mxu0 0
  %742 = vmatpush2.bf16.msra.mxu0 0
  %743 = vmatprep.subr.bf16.mxu0 0
  %744 = vmatpush2.bf16.msra.mxu0 0
  %745 = vmatprep.subr.bf16.mxu0 0
  %746 = vmatpush2.bf16.msra.mxu0 0
  %747 = vmatprep.subr.bf16.mxu0 0
  %748 = vmatpush2.bf16.msra.mxu0 0
  %749 = vmatprep.subr.bf16.mxu0 0
  %750 = vmatpush2.bf16.msra.mxu0 0
  %751 = vmatprep.subr.bf16.mxu0 0
  %752 = vmatpush2.bf16.msra.mxu0 0
  %753 = vmatprep.subr.bf16.mxu0 0
  %754 = vmatpush2.bf16.msra.mxu0 0
  %755 = vmatprep.mubr.bf16.mxu0 0
  %756 = vmatmul.mubr.bf16.gmra.mxu0 %v721
  %v757 = vpop.f32.mrf.mxu0
  %v758 = vadd.f32 0.0, %v757
  %v759 = vpop.f32.mrf.mxu0
  %v760 = vpop.f32.mrf.mxu0
  %v761 = vpop.f32.mrf.mxu0
  %762 = vdwg.mxu0
  %v763 = vadd.f32 %v145, %v758
  %765 = vrot.lane.b32.xlu0 %v694, 32
  %v766 = vpop.permute.xlu0 %765
  %769 = vrot.lane.b32.xlu0 %v715, 64
  %v770 = vpop.permute.xlu0 %769
  %v772 = vsel %vm197, %v766, %v770
  %v773 = vpack.c.bf16 %v772, %v772
  %v775 = vsel %vm341, %v773, 0
  %777 = vmatprep.subr.bf16.mxu0 0
  %778 = vmatpush1.bf16.msra.mxu0 0
  %779 = vmatprep.subr.bf16.mxu0 0
  %780 = vmatpush1.bf16.msra.mxu0 0
  %781 = vmatprep.subr.bf16.mxu0 0
  %782 = vmatpush1.bf16.msra.mxu0 0
  %783 = vmatprep.subr.bf16.mxu0 0
  %784 = vmatpush1.bf16.msra.mxu0 0
  %785 = vmatprep.subr.bf16.mxu0 0
  %786 = vmatpush1.bf16.msra.mxu0 %v336
  %787 = vmatprep.subr.bf16.mxu0 0
  %788 = vmatpush1.bf16.msra.mxu0 %v335
  %789 = vmatprep.subr.bf16.mxu0 0
  %790 = vmatpush1.bf16.msra.mxu0 %v334
  %791 = vmatprep.subr.bf16.mxu0 0
  %792 = vmatpush1.bf16.msra.mxu0 %v333
  %793 = vmatprep.subr.bf16.mxu0 0
  %794 = vmatpush2.bf16.msra.mxu0 0
  %795 = vmatprep.subr.bf16.mxu0 0
  %796 = vmatpush2.bf16.msra.mxu0 0
  %797 = vmatprep.subr.bf16.mxu0 0
  %798 = vmatpush2.bf16.msra.mxu0 0
  %799 = vmatprep.subr.bf16.mxu0 0
  %800 = vmatpush2.bf16.msra.mxu0 0
  %801 = vmatprep.subr.bf16.mxu0 0
  %802 = vmatpush2.bf16.msra.mxu0 0
  %803 = vmatprep.subr.bf16.mxu0 0
  %804 = vmatpush2.bf16.msra.mxu0 0
  %805 = vmatprep.subr.bf16.mxu0 0
  %806 = vmatpush2.bf16.msra.mxu0 0
  %807 = vmatprep.subr.bf16.mxu0 0
  %808 = vmatpush2.bf16.msra.mxu0 0
  %809 = vmatprep.mubr.bf16.mxu0 0
  %810 = vmatmul.mubr.bf16.gmra.mxu0 %v775
  %v811 = vpop.f32.mrf.mxu0
  %v812 = vadd.f32 0.0, %v811
  %v813 = vpop.f32.mrf.mxu0
  %v814 = vpop.f32.mrf.mxu0
  %v815 = vpop.f32.mrf.mxu0
  %816 = vdwg.mxu0
  %v817 = vadd.f32 %v176, %v812
  %v818 = vmul.f32 %v763, %v183
  %v819 = vtanh.pop %v818
  %v820 = vmul.f32 %v819, %v183
  %v821 = vadd.f32 %v820, %v184
  %v822 = vmul.f32 %v821, %v688
  %824 = vrot.lane.b32.xlu0 %v821, 64
  %v825 = vpop.permute.xlu0 %824
  %v827 = vmul.f32 %v821, %v825
  %829 = vrot.lane.b32.xlu0 %v827, 32
  %v830 = vpop.permute.xlu0 %829
  %v832 = vadd.f32 %v822, %v830
  %v833 = vtanh.pop %v832
  %835 = vrot.lane.b32.xlu0 %v833, 64
  %v836 = vpop.permute.xlu0 %835
  %v838 = vmul.f32 %v821, %v836
  %v839 = vmul.f32 %v817, %v183
  %v840 = vtanh.pop %v839
  %v841 = vmul.f32 %v840, %v183
  %v842 = vadd.f32 %v841, %v184
  %v843 = vmul.f32 %v842, %v709
  %845 = vrot.lane.b32.xlu0 %v842, 64
  %v846 = vpop.permute.xlu0 %845
  %v848 = vmul.f32 %v842, %v846
  %850 = vrot.lane.b32.xlu0 %v848, 32
  %v851 = vpop.permute.xlu0 %850
  %v853 = vadd.f32 %v843, %v851
  %v854 = vtanh.pop %v853
  %856 = vrot.lane.b32.xlu0 %v854, 64
  %v857 = vpop.permute.xlu0 %856
  %v859 = vmul.f32 %v842, %v857
  %v860 = vpack.c.bf16 %v838, %v838
  %862 = vrot.lane.b32.xlu0 %v860, 32
  %v863 = vpop.permute.xlu0 %862
  %v865 = vsel %vm197, %v863, 0
  %867 = vmatprep.subr.bf16.mxu0 0
  %868 = vmatpush1.bf16.msra.mxu0 0
  %869 = vmatprep.subr.bf16.mxu0 0
  %870 = vmatpush1.bf16.msra.mxu0 0
  %871 = vmatprep.subr.bf16.mxu0 0
  %872 = vmatpush1.bf16.msra.mxu0 0
  %873 = vmatprep.subr.bf16.mxu0 0
  %874 = vmatpush1.bf16.msra.mxu0 0
  %875 = vmatprep.subr.bf16.mxu0 0
  %876 = vmatpush1.bf16.msra.mxu0 0
  %877 = vmatprep.subr.bf16.mxu0 0
  %878 = vmatpush1.bf16.msra.mxu0 0
  %879 = vmatprep.subr.bf16.mxu0 0
  %880 = vmatpush1.bf16.msra.mxu0 %v194
  %881 = vmatprep.subr.bf16.mxu0 0
  %882 = vmatpush1.bf16.msra.mxu0 %v193
  %883 = vmatprep.subr.bf16.mxu0 0
  %884 = vmatpush2.bf16.msra.mxu0 0
  %885 = vmatprep.subr.bf16.mxu0 0
  %886 = vmatpush2.bf16.msra.mxu0 0
  %887 = vmatprep.subr.bf16.mxu0 0
  %888 = vmatpush2.bf16.msra.mxu0 0
  %889 = vmatprep.subr.bf16.mxu0 0
  %890 = vmatpush2.bf16.msra.mxu0 0
  %891 = vmatprep.subr.bf16.mxu0 0
  %892 = vmatpush2.bf16.msra.mxu0 0
  %893 = vmatprep.subr.bf16.mxu0 0
  %894 = vmatpush2.bf16.msra.mxu0 0
  %895 = vmatprep.subr.bf16.mxu0 0
  %896 = vmatpush2.bf16.msra.mxu0 0
  %897 = vmatprep.subr.bf16.mxu0 0
  %898 = vmatpush2.bf16.msra.mxu0 0
  %899 = vmatprep.mubr.bf16.mxu0 0
  %900 = vmatmul.mubr.bf16.gmra.mxu0 %v865
  %v901 = vpop.f32.mrf.mxu0
  %v902 = vadd.f32 0.0, %v901
  %v903 = vpop.f32.mrf.mxu0
  %v904 = vpop.f32.mrf.mxu0
  %v905 = vpop.f32.mrf.mxu0
  %906 = vdwg.mxu0
  %v907 = vadd.f32 %v148, %v902
  %909 = vrot.lane.b32.xlu0 %v838, 32
  %v910 = vpop.permute.xlu0 %909
  %913 = vrot.lane.b32.xlu0 %v859, 64
  %v914 = vpop.permute.xlu0 %913
  %v916 = vsel %vm197, %v910, %v914
  %v917 = vpack.c.bf16 %v916, %v916
  %v919 = vsel %vm341, %v917, 0
  %921 = vmatprep.subr.bf16.mxu0 0
  %922 = vmatpush1.bf16.msra.mxu0 0
  %923 = vmatprep.subr.bf16.mxu0 0
  %924 = vmatpush1.bf16.msra.mxu0 0
  %925 = vmatprep.subr.bf16.mxu0 0
  %926 = vmatpush1.bf16.msra.mxu0 0
  %927 = vmatprep.subr.bf16.mxu0 0
  %928 = vmatpush1.bf16.msra.mxu0 0
  %929 = vmatprep.subr.bf16.mxu0 0
  %930 = vmatpush1.bf16.msra.mxu0 %v336
  %931 = vmatprep.subr.bf16.mxu0 0
  %932 = vmatpush1.bf16.msra.mxu0 %v335
  %933 = vmatprep.subr.bf16.mxu0 0
  %934 = vmatpush1.bf16.msra.mxu0 %v334
  %935 = vmatprep.subr.bf16.mxu0 0
  %936 = vmatpush1.bf16.msra.mxu0 %v333
  %937 = vmatprep.subr.bf16.mxu0 0
  %938 = vmatpush2.bf16.msra.mxu0 0
  %939 = vmatprep.subr.bf16.mxu0 0
  %940 = vmatpush2.bf16.msra.mxu0 0
  %941 = vmatprep.subr.bf16.mxu0 0
  %942 = vmatpush2.bf16.msra.mxu0 0
  %943 = vmatprep.subr.bf16.mxu0 0
  %944 = vmatpush2.bf16.msra.mxu0 0
  %945 = vmatprep.subr.bf16.mxu0 0
  %946 = vmatpush2.bf16.msra.mxu0 0
  %947 = vmatprep.subr.bf16.mxu0 0
  %948 = vmatpush2.bf16.msra.mxu0 0
  %949 = vmatprep.subr.bf16.mxu0 0
  %950 = vmatpush2.bf16.msra.mxu0 0
  %951 = vmatprep.subr.bf16.mxu0 0
  %952 = vmatpush2.bf16.msra.mxu0 0
  %953 = vmatprep.mubr.bf16.mxu0 0
  %954 = vmatmul.mubr.bf16.gmra.mxu0 %v919
  %v955 = vpop.f32.mrf.mxu0
  %v956 = vadd.f32 0.0, %v955
  %v957 = vpop.f32.mrf.mxu0
  %v958 = vpop.f32.mrf.mxu0
  %v959 = vpop.f32.mrf.mxu0
  %960 = vdwg.mxu0
  %v961 = vadd.f32 %v176, %v956
  %v962 = vmul.f32 %v907, %v183
  %v963 = vtanh.pop %v962
  %v964 = vmul.f32 %v963, %v183
  %v965 = vadd.f32 %v964, %v184
  %v966 = vmul.f32 %v965, %v832
  %968 = vrot.lane.b32.xlu0 %v965, 64
  %v969 = vpop.permute.xlu0 %968
  %v971 = vmul.f32 %v965, %v969
  %973 = vrot.lane.b32.xlu0 %v971, 32
  %v974 = vpop.permute.xlu0 %973
  %v976 = vadd.f32 %v966, %v974
  %v977 = vtanh.pop %v976
  %979 = vrot.lane.b32.xlu0 %v977, 64
  %v980 = vpop.permute.xlu0 %979
  %v982 = vmul.f32 %v965, %v980
  %v983 = vmul.f32 %v961, %v183
  %v984 = vtanh.pop %v983
  %v985 = vmul.f32 %v984, %v183
  %v986 = vadd.f32 %v985, %v184
  %v987 = vmul.f32 %v986, %v853
  %989 = vrot.lane.b32.xlu0 %v986, 64
  %v990 = vpop.permute.xlu0 %989
  %v992 = vmul.f32 %v986, %v990
  %994 = vrot.lane.b32.xlu0 %v992, 32
  %v995 = vpop.permute.xlu0 %994
  %v997 = vadd.f32 %v987, %v995
  %v998 = vtanh.pop %v997
  %1000 = vrot.lane.b32.xlu0 %v998, 64
  %v1001 = vpop.permute.xlu0 %1000
  %v1003 = vmul.f32 %v986, %v1001
  %v1004 = vpack.c.bf16 %v982, %v982
  %1006 = vrot.lane.b32.xlu0 %v1004, 32
  %v1007 = vpop.permute.xlu0 %1006
  %v1009 = vsel %vm197, %v1007, 0
  %1011 = vmatprep.subr.bf16.mxu0 0
  %1012 = vmatpush1.bf16.msra.mxu0 0
  %1013 = vmatprep.subr.bf16.mxu0 0
  %1014 = vmatpush1.bf16.msra.mxu0 0
  %1015 = vmatprep.subr.bf16.mxu0 0
  %1016 = vmatpush1.bf16.msra.mxu0 0
  %1017 = vmatprep.subr.bf16.mxu0 0
  %1018 = vmatpush1.bf16.msra.mxu0 0
  %1019 = vmatprep.subr.bf16.mxu0 0
  %1020 = vmatpush1.bf16.msra.mxu0 0
  %1021 = vmatprep.subr.bf16.mxu0 0
  %1022 = vmatpush1.bf16.msra.mxu0 0
  %1023 = vmatprep.subr.bf16.mxu0 0
  %1024 = vmatpush1.bf16.msra.mxu0 %v194
  %1025 = vmatprep.subr.bf16.mxu0 0
  %1026 = vmatpush1.bf16.msra.mxu0 %v193
  %1027 = vmatprep.subr.bf16.mxu0 0
  %1028 = vmatpush2.bf16.msra.mxu0 0
  %1029 = vmatprep.subr.bf16.mxu0 0
  %1030 = vmatpush2.bf16.msra.mxu0 0
  %1031 = vmatprep.subr.bf16.mxu0 0
  %1032 = vmatpush2.bf16.msra.mxu0 0
  %1033 = vmatprep.subr.bf16.mxu0 0
  %1034 = vmatpush2.bf16.msra.mxu0 0
  %1035 = vmatprep.subr.bf16.mxu0 0
  %1036 = vmatpush2.bf16.msra.mxu0 0
  %1037 = vmatprep.subr.bf16.mxu0 0
  %1038 = vmatpush2.bf16.msra.mxu0 0
  %1039 = vmatprep.subr.bf16.mxu0 0
  %1040 = vmatpush2.bf16.msra.mxu0 0
  %1041 = vmatprep.subr.bf16.mxu0 0
  %1042 = vmatpush2.bf16.msra.mxu0 0
  %1043 = vmatprep.mubr.bf16.mxu0 0
  %1044 = vmatmul.mubr.bf16.gmra.mxu0 %v1009
  %v1045 = vpop.f32.mrf.mxu0
  %v1046 = vadd.f32 0.0, %v1045
  %v1047 = vpop.f32.mrf.mxu0
  %v1048 = vpop.f32.mrf.mxu0
  %v1049 = vpop.f32.mrf.mxu0
  %1050 = vdwg.mxu0
  %v1051 = vadd.f32 %v153, %v1046
  %1053 = vrot.lane.b32.xlu0 %v982, 32
  %v1054 = vpop.permute.xlu0 %1053
  %1057 = vrot.lane.b32.xlu0 %v1003, 64
  %v1058 = vpop.permute.xlu0 %1057
  %v1060 = vsel %vm197, %v1054, %v1058
  %v1061 = vpack.c.bf16 %v1060, %v1060
  %v1063 = vsel %vm341, %v1061, 0
  %1065 = vmatprep.subr.bf16.mxu0 0
  %1066 = vmatpush1.bf16.msra.mxu0 0
  %1067 = vmatprep.subr.bf16.mxu0 0
  %1068 = vmatpush1.bf16.msra.mxu0 0
  %1069 = vmatprep.subr.bf16.mxu0 0
  %1070 = vmatpush1.bf16.msra.mxu0 0
  %1071 = vmatprep.subr.bf16.mxu0 0
  %1072 = vmatpush1.bf16.msra.mxu0 0
  %1073 = vmatprep.subr.bf16.mxu0 0
  %1074 = vmatpush1.bf16.msra.mxu0 %v336
  %1075 = vmatprep.subr.bf16.mxu0 0
  %1076 = vmatpush1.bf16.msra.mxu0 %v335
  %1077 = vmatprep.subr.bf16.mxu0 0
  %1078 = vmatpush1.bf16.msra.mxu0 %v334
  %1079 = vmatprep.subr.bf16.mxu0 0
  %1080 = vmatpush1.bf16.msra.mxu0 %v333
  %1081 = vmatprep.subr.bf16.mxu0 0
  %1082 = vmatpush2.bf16.msra.mxu0 0
  %1083 = vmatprep.subr.bf16.mxu0 0
  %1084 = vmatpush2.bf16.msra.mxu0 0
  %1085 = vmatprep.subr.bf16.mxu0 0
  %1086 = vmatpush2.bf16.msra.mxu0 0
  %1087 = vmatprep.subr.bf16.mxu0 0
  %1088 = vmatpush2.bf16.msra.mxu0 0
  %1089 = vmatprep.subr.bf16.mxu0 0
  %1090 = vmatpush2.bf16.msra.mxu0 0
  %1091 = vmatprep.subr.bf16.mxu0 0
  %1092 = vmatpush2.bf16.msra.mxu0 0
  %1093 = vmatprep.subr.bf16.mxu0 0
  %1094 = vmatpush2.bf16.msra.mxu0 0
  %1095 = vmatprep.subr.bf16.mxu0 0
  %1096 = vmatpush2.bf16.msra.mxu0 0
  %1097 = vmatprep.mubr.bf16.mxu0 0
  %1098 = vmatmul.mubr.bf16.gmra.mxu0 %v1063
  %v1099 = vpop.f32.mrf.mxu0
  %v1100 = vadd.f32 0.0, %v1099
  %v1101 = vpop.f32.mrf.mxu0
  %v1102 = vpop.f32.mrf.mxu0
  %v1103 = vpop.f32.mrf.mxu0
  %1104 = vdwg.mxu0
  %v1105 = vadd.f32 %v176, %v1100
  %v1106 = vmul.f32 %v1051, %v183
  %v1107 = vtanh.pop %v1106
  %v1108 = vmul.f32 %v1107, %v183
  %v1109 = vadd.f32 %v1108, %v184
  %v1110 = vmul.f32 %v1109, %v976
  %1112 = vrot.lane.b32.xlu0 %v1109, 64
  %v1113 = vpop.permute.xlu0 %1112
  %v1115 = vmul.f32 %v1109, %v1113
  %1117 = vrot.lane.b32.xlu0 %v1115, 32
  %v1118 = vpop.permute.xlu0 %1117
  %v1120 = vadd.f32 %v1110, %v1118
  %v1121 = vtanh.pop %v1120
  %1123 = vrot.lane.b32.xlu0 %v1121, 64
  %v1124 = vpop.permute.xlu0 %1123
  %v1126 = vmul.f32 %v1109, %v1124
  %v1127 = vmul.f32 %v1105, %v183
  %v1128 = vtanh.pop %v1127
  %v1129 = vmul.f32 %v1128, %v183
  %v1130 = vadd.f32 %v1129, %v184
  %v1131 = vmul.f32 %v1130, %v997
  %1133 = vrot.lane.b32.xlu0 %v1130, 64
  %v1134 = vpop.permute.xlu0 %1133
  %v1136 = vmul.f32 %v1130, %v1134
  %1138 = vrot.lane.b32.xlu0 %v1136, 32
  %v1139 = vpop.permute.xlu0 %1138
  %v1141 = vadd.f32 %v1131, %v1139
  %v1142 = vtanh.pop %v1141
  %1144 = vrot.lane.b32.xlu0 %v1142, 64
  %v1145 = vpop.permute.xlu0 %1144
  %v1147 = vmul.f32 %v1130, %v1145
  %v1148 = vpack.c.bf16 %v1126, %v1126
  %1150 = vrot.lane.b32.xlu0 %v1148, 32
  %v1151 = vpop.permute.xlu0 %1150
  %v1153 = vsel %vm197, %v1151, 0
  %1155 = vmatprep.subr.bf16.mxu0 0
  %1156 = vmatpush1.bf16.msra.mxu0 0
  %1157 = vmatprep.subr.bf16.mxu0 0
  %1158 = vmatpush1.bf16.msra.mxu0 0
  %1159 = vmatprep.subr.bf16.mxu0 0
  %1160 = vmatpush1.bf16.msra.mxu0 0
  %1161 = vmatprep.subr.bf16.mxu0 0
  %1162 = vmatpush1.bf16.msra.mxu0 0
  %1163 = vmatprep.subr.bf16.mxu0 0
  %1164 = vmatpush1.bf16.msra.mxu0 0
  %1165 = vmatprep.subr.bf16.mxu0 0
  %1166 = vmatpush1.bf16.msra.mxu0 0
  %1167 = vmatprep.subr.bf16.mxu0 0
  %1168 = vmatpush1.bf16.msra.mxu0 %v194
  %1169 = vmatprep.subr.bf16.mxu0 0
  %1170 = vmatpush1.bf16.msra.mxu0 %v193
  %1171 = vmatprep.subr.bf16.mxu0 0
  %1172 = vmatpush2.bf16.msra.mxu0 0
  %1173 = vmatprep.subr.bf16.mxu0 0
  %1174 = vmatpush2.bf16.msra.mxu0 0
  %1175 = vmatprep.subr.bf16.mxu0 0
  %1176 = vmatpush2.bf16.msra.mxu0 0
  %1177 = vmatprep.subr.bf16.mxu0 0
  %1178 = vmatpush2.bf16.msra.mxu0 0
  %1179 = vmatprep.subr.bf16.mxu0 0
  %1180 = vmatpush2.bf16.msra.mxu0 0
  %1181 = vmatprep.subr.bf16.mxu0 0
  %1182 = vmatpush2.bf16.msra.mxu0 0
  %1183 = vmatprep.subr.bf16.mxu0 0
  %1184 = vmatpush2.bf16.msra.mxu0 0
  %1185 = vmatprep.subr.bf16.mxu0 0
  %1186 = vmatpush2.bf16.msra.mxu0 0
  %1187 = vmatprep.mubr.bf16.mxu0 0
  %1188 = vmatmul.mubr.bf16.gmra.mxu0 %v1153
  %v1189 = vpop.f32.mrf.mxu0
  %v1190 = vadd.f32 0.0, %v1189
  %v1191 = vpop.f32.mrf.mxu0
  %v1192 = vpop.f32.mrf.mxu0
  %v1193 = vpop.f32.mrf.mxu0
  %1194 = vdwg.mxu0
  %v1195 = vadd.f32 %v156, %v1190
  %1197 = vrot.lane.b32.xlu0 %v1126, 32
  %v1198 = vpop.permute.xlu0 %1197
  %1201 = vrot.lane.b32.xlu0 %v1147, 64
  %v1202 = vpop.permute.xlu0 %1201
  %v1204 = vsel %vm197, %v1198, %v1202
  %v1205 = vpack.c.bf16 %v1204, %v1204
  %v1207 = vsel %vm341, %v1205, 0
  %1209 = vmatprep.subr.bf16.mxu0 0
  %1210 = vmatpush1.bf16.msra.mxu0 0
  %1211 = vmatprep.subr.bf16.mxu0 0
  %1212 = vmatpush1.bf16.msra.mxu0 0
  %1213 = vmatprep.subr.bf16.mxu0 0
  %1214 = vmatpush1.bf16.msra.mxu0 0
  %1215 = vmatprep.subr.bf16.mxu0 0
  %1216 = vmatpush1.bf16.msra.mxu0 0
  %1217 = vmatprep.subr.bf16.mxu0 0
  %1218 = vmatpush1.bf16.msra.mxu0 %v336
  %1219 = vmatprep.subr.bf16.mxu0 0
  %1220 = vmatpush1.bf16.msra.mxu0 %v335
  %1221 = vmatprep.subr.bf16.mxu0 0
  %1222 = vmatpush1.bf16.msra.mxu0 %v334
  %1223 = vmatprep.subr.bf16.mxu0 0
  %1224 = vmatpush1.bf16.msra.mxu0 %v333
  %1225 = vmatprep.subr.bf16.mxu0 0
  %1226 = vmatpush2.bf16.msra.mxu0 0
  %1227 = vmatprep.subr.bf16.mxu0 0
  %1228 = vmatpush2.bf16.msra.mxu0 0
  %1229 = vmatprep.subr.bf16.mxu0 0
  %1230 = vmatpush2.bf16.msra.mxu0 0
  %1231 = vmatprep.subr.bf16.mxu0 0
  %1232 = vmatpush2.bf16.msra.mxu0 0
  %1233 = vmatprep.subr.bf16.mxu0 0
  %1234 = vmatpush2.bf16.msra.mxu0 0
  %1235 = vmatprep.subr.bf16.mxu0 0
  %1236 = vmatpush2.bf16.msra.mxu0 0
  %1237 = vmatprep.subr.bf16.mxu0 0
  %1238 = vmatpush2.bf16.msra.mxu0 0
  %1239 = vmatprep.subr.bf16.mxu0 0
  %1240 = vmatpush2.bf16.msra.mxu0 0
  %1241 = vmatprep.mubr.bf16.mxu0 0
  %1242 = vmatmul.mubr.bf16.gmra.mxu0 %v1207
  %v1243 = vpop.f32.mrf.mxu0
  %v1244 = vadd.f32 0.0, %v1243
  %v1245 = vpop.f32.mrf.mxu0
  %v1246 = vpop.f32.mrf.mxu0
  %v1247 = vpop.f32.mrf.mxu0
  %1248 = vdwg.mxu0
  %v1249 = vadd.f32 %v176, %v1244
  %v1250 = vmul.f32 %v1195, %v183
  %v1251 = vtanh.pop %v1250
  %v1252 = vmul.f32 %v1251, %v183
  %v1253 = vadd.f32 %v1252, %v184
  %v1254 = vmul.f32 %v1253, %v1120
  %1256 = vrot.lane.b32.xlu0 %v1253, 64
  %v1257 = vpop.permute.xlu0 %1256
  %v1259 = vmul.f32 %v1253, %v1257
  %1261 = vrot.lane.b32.xlu0 %v1259, 32
  %v1262 = vpop.permute.xlu0 %1261
  %v1264 = vadd.f32 %v1254, %v1262
  %v1265 = vtanh.pop %v1264
  %1267 = vrot.lane.b32.xlu0 %v1265, 64
  %v1268 = vpop.permute.xlu0 %1267
  %v1270 = vmul.f32 %v1253, %v1268
  %v1271 = vmul.f32 %v1249, %v183
  %v1272 = vtanh.pop %v1271
  %v1273 = vmul.f32 %v1272, %v183
  %v1274 = vadd.f32 %v1273, %v184
  %v1275 = vmul.f32 %v1274, %v1141
  %1277 = vrot.lane.b32.xlu0 %v1274, 64
  %v1278 = vpop.permute.xlu0 %1277
  %v1280 = vmul.f32 %v1274, %v1278
  %1282 = vrot.lane.b32.xlu0 %v1280, 32
  %v1283 = vpop.permute.xlu0 %1282
  %v1285 = vadd.f32 %v1275, %v1283
  %v1286 = vtanh.pop %v1285
  %1288 = vrot.lane.b32.xlu0 %v1286, 64
  %v1289 = vpop.permute.xlu0 %1288
  %v1291 = vmul.f32 %v1274, %v1289
  %1293 = vrot.lane.b32.xlu0 %v1270, 32
  %v1294 = vpop.permute.xlu0 %1293
  %1297 = vrot.lane.b32.xlu0 %v1291, 64
  %v1298 = vpop.permute.xlu0 %1297
  %v1300 = vsel %vm197, %v1294, %v1298
  %v1301 = vpack.c.bf16 %v1300, %v1300
  %v1303 = vsel %vm341, %v1301, 0
  %1305 = vmatprep.subr.bf16.mxu0 0
  %1306 = vmatpush1.bf16.msra.mxu0 0
  %1307 = vmatprep.subr.bf16.mxu0 0
  %1308 = vmatpush1.bf16.msra.mxu0 0
  %1309 = vmatprep.subr.bf16.mxu0 0
  %1310 = vmatpush1.bf16.msra.mxu0 0
  %1311 = vmatprep.subr.bf16.mxu0 0
  %1312 = vmatpush1.bf16.msra.mxu0 0
  %1313 = vmatprep.subr.bf16.mxu0 0
  %1314 = vmatpush1.bf16.msra.mxu0 %v336
  %1315 = vmatprep.subr.bf16.mxu0 0
  %1316 = vmatpush1.bf16.msra.mxu0 %v335
  %1317 = vmatprep.subr.bf16.mxu0 0
  %1318 = vmatpush1.bf16.msra.mxu0 %v334
  %1319 = vmatprep.subr.bf16.mxu0 0
  %1320 = vmatpush1.bf16.msra.mxu0 %v333
  %1321 = vmatprep.subr.bf16.mxu0 0
  %1322 = vmatpush2.bf16.msra.mxu0 0
  %1323 = vmatprep.subr.bf16.mxu0 0
  %1324 = vmatpush2.bf16.msra.mxu0 0
  %1325 = vmatprep.subr.bf16.mxu0 0
  %1326 = vmatpush2.bf16.msra.mxu0 0
  %1327 = vmatprep.subr.bf16.mxu0 0
  %1328 = vmatpush2.bf16.msra.mxu0 0
  %1329 = vmatprep.subr.bf16.mxu0 0
  %1330 = vmatpush2.bf16.msra.mxu0 0
  %1331 = vmatprep.subr.bf16.mxu0 0
  %1332 = vmatpush2.bf16.msra.mxu0 0
  %1333 = vmatprep.subr.bf16.mxu0 0
  %1334 = vmatpush2.bf16.msra.mxu0 0
  %1335 = vmatprep.subr.bf16.mxu0 0
  %1336 = vmatpush2.bf16.msra.mxu0 0
  %1337 = vmatprep.mubr.bf16.mxu0 0
  %1338 = vmatmul.mubr.bf16.gmra.mxu0 %v1303
  %v1339 = vpop.f32.mrf.mxu0
  %v1340 = vadd.f32 0.0, %v1339
  %v1341 = vpop.f32.mrf.mxu0
  %v1342 = vpop.f32.mrf.mxu0
  %v1343 = vpop.f32.mrf.mxu0
  %1344 = vdwg.mxu0
  %v1345 = vadd.f32 %v176, %v1340
  %v1346 = vmul.f32 %v1345, %v183
  %v1347 = vtanh.pop %v1346
  %v1348 = vmul.f32 %v1347, %v183
  %v1349 = vadd.f32 %v1348, %v184
  %v1350 = vmul.f32 %v1349, %v1285
  %1352 = vrot.lane.b32.xlu0 %v1349, 64
  %v1353 = vpop.permute.xlu0 %1352
  %v1355 = vmul.f32 %v1349, %v1353
  %1357 = vrot.lane.b32.xlu0 %v1355, 32
  %v1358 = vpop.permute.xlu0 %1357
  %v1360 = vadd.f32 %v1350, %v1358
  %v1361 = vtanh.pop %v1360
  %1363 = vrot.lane.b32.xlu0 %v1361, 64
  %v1364 = vpop.permute.xlu0 %1363
  %v1366 = vmul.f32 %v1349, %v1364
  %v1367 = vpack.c.bf16 %v1366, %v1366
  %v1368 = vld [vmem:[%s6] sm:$0xf]
  %v1369 = vld [vmem:[%s6 + $0x4] sm:$0xf]
  %v1370 = vld [vmem:[%s6 + $0x8] sm:$0xf]
  %v1371 = vld [vmem:[%s6 + $0xc] sm:$0xf]
  %v1372 = vld [vmem:[%s7] sm:$0x1]
  %v1374 = vlaneseq
  %v1375 = vshrl.u32 %v1374, 7
  %v1376 = vsub.s32 0, %v1375
  %v1377 = vrot.slane %v1372, %v1376
  %1380 = vrot.lane.b32.xlu0 %v1367, 32
  %v1381 = vpop.permute.xlu0 %1380
  %v1386 = vunpack.c.l.b16 %v1368
  %v1387 = vunpack.c.l.b16 %v1369
  %v1388 = vunpack.c.l.b16 %v1370
  %v1389 = vunpack.c.l.b16 %v1371
  %v1390 = vpack.c.b16 %v1387, %v1386
  %v1391 = vpack.c.b16 %v1389, %v1388
  %v1395 = vsel %vm197, %v1381, 0
  %1397 = vmatprep.subr.bf16.mxu0 0
  %1398 = vmatpush1.bf16.msra.mxu0 0
  %1399 = vmatprep.subr.bf16.mxu0 0
  %1400 = vmatpush1.bf16.msra.mxu0 0
  %1401 = vmatprep.subr.bf16.mxu0 0
  %1402 = vmatpush1.bf16.msra.mxu0 0
  %1403 = vmatprep.subr.bf16.mxu0 0
  %1404 = vmatpush1.bf16.msra.mxu0 0
  %1405 = vmatprep.subr.bf16.mxu0 0
  %1406 = vmatpush1.bf16.msra.mxu0 0
  %1407 = vmatprep.subr.bf16.mxu0 0
  %1408 = vmatpush1.bf16.msra.mxu0 0
  %1409 = vmatprep.subr.bf16.mxu0 0
  %1410 = vmatpush1.bf16.msra.mxu0 %v1391
  %1411 = vmatprep.subr.bf16.mxu0 0
  %1412 = vmatpush1.bf16.msra.mxu0 %v1390
  %1413 = vmatprep.subr.bf16.mxu0 0
  %1414 = vmatpush2.bf16.msra.mxu0 0
  %1415 = vmatprep.subr.bf16.mxu0 0
  %1416 = vmatpush2.bf16.msra.mxu0 0
  %1417 = vmatprep.subr.bf16.mxu0 0
  %1418 = vmatpush2.bf16.msra.mxu0 0
  %1419 = vmatprep.subr.bf16.mxu0 0
  %1420 = vmatpush2.bf16.msra.mxu0 0
  %1421 = vmatprep.subr.bf16.mxu0 0
  %1422 = vmatpush2.bf16.msra.mxu0 0
  %1423 = vmatprep.subr.bf16.mxu0 0
  %1424 = vmatpush2.bf16.msra.mxu0 0
  %1425 = vmatprep.subr.bf16.mxu0 0
  %1426 = vmatpush2.bf16.msra.mxu0 0
  %1427 = vmatprep.subr.bf16.mxu0 0
  %1428 = vmatpush2.bf16.msra.mxu0 0
  %1429 = vmatprep.mubr.bf16.mxu0 0
  %1430 = vmatmul.mubr.bf16.gmra.mxu0 %v1395
  %v1431 = vpop.f32.mrf.mxu0
  %v1432 = vadd.f32 %v1377, %v1431
  %v1433 = vpop.f32.mrf.mxu0
  %v1434 = vpop.f32.mrf.mxu0
  %v1435 = vpop.f32.mrf.mxu0
  %1436 = vdwg.mxu0
  %1437 = vst [vmem:[%s8] sm:$0xff] %v1432
  // Predicated region
  $region34: #{_lstmv2_forward_impl.1} parent=0 // pred_check
    _
  $region35: #{_lstmv2_forward_impl.1} parent=0 // pred_check_branch
    %1439 = sbr.rel (0) target = $region37
  $region36: #{_lstmv2_forward_impl.1} parent=0 // pred_region
    _
  $region37: #{_lstmv2_forward_impl.1} parent=0 // pred_fallthru
    _
  // Predicated region
  $region38: #{_lstmv2_forward_impl.1} parent=0 // pred_check
    _
  $region39: #{_lstmv2_forward_impl.1} parent=0 // pred_check_branch
    %1441 = sbr.rel (0) target = $region41
  $region40: #{_lstmv2_forward_impl.1} parent=0 // pred_region
    _
  $region41: #{_lstmv2_forward_impl.1} parent=0 // pred_fallthru
    _

</llo_original>
